<compile_context>
chip_gen: v5e
topology: v5e:2x2
jax: 0.10.0
libtpu: 0.0.40
codegen_flags: <defaults>
</compile_context>

<pallas_src>
import functools

import numpy as np
import jax
import jax.numpy as jnp
from jax import lax
from jax.experimental import pallas as pl
from jax.experimental.pallas import tpu as pltpu

BN_EPS = 0.8  # nn.BatchNorm1d(out_feat, 0.8): second positional arg is eps.


def _round_up(x, m):
    return (x + m - 1) // m * m


def _leaky(h):
    # exact for slope < 1; mul+max instead of compare+select
    return jnp.maximum(h, 0.2 * h)


def _mlp_tail(h1, w2_ref, b2_ref, w3_ref, b3_ref, w4_ref, b4_ref):
    """Layers 2-4 (BN already folded into w2/b2, w3/b3)."""
    h2 = _leaky(jnp.dot(h1.astype(jnp.bfloat16), w2_ref[...],
                        preferred_element_type=jnp.float32) + b2_ref[...])
    h3 = _leaky(jnp.dot(h2.astype(jnp.bfloat16), w3_ref[...],
                        preferred_element_type=jnp.float32) + b3_ref[...])
    return jnp.dot(h3.astype(jnp.bfloat16), w4_ref[...],
                   preferred_element_type=jnp.float32) + b4_ref[...]


def _encoder_kernel_resident(x_ref, w1_ref, b1_ref,
                             w2_ref, b2_ref, w3_ref, b3_ref,
                             w4_ref, b4_ref, z_ref):
    """grid=(nb,): whole D dim in one shot, w1 resident in VMEM."""
    x = x_ref[...].astype(jnp.bfloat16)            # in-kernel f32 -> bf16 cast
    h1 = _leaky(jnp.dot(x, w1_ref[...],
                        preferred_element_type=jnp.float32) + b1_ref[...])
    z = _mlp_tail(h1, w2_ref, b2_ref, w3_ref, b3_ref, w4_ref, b4_ref)
    z_ref[...] = z.astype(z_ref.dtype)


def _encoder_kernel_streamed(x_ref, w1_ref, b1_ref,
                             w2_ref, b2_ref, w3_ref, b3_ref,
                             w4_ref, b4_ref, z_ref, acc_ref):
    """grid=(nb, nk): K-streamed layer 1 with f32 VMEM accumulator (huge D)."""
    k = pl.program_id(1)

    @pl.when(k == 0)
    def _():
        acc_ref[...] = jnp.zeros_like(acc_ref)

    acc_ref[...] += jnp.dot(x_ref[...].astype(jnp.bfloat16), w1_ref[...],
                            preferred_element_type=jnp.float32)

    @pl.when(k == pl.num_programs(1) - 1)
    def _():
        h1 = _leaky(acc_ref[...] + b1_ref[...])
        z = _mlp_tail(h1, w2_ref, b2_ref, w3_ref, b3_ref, w4_ref, b4_ref)
        z_ref[...] = z.astype(z_ref.dtype)


def _fold_bn_into_linear(w, b, bn):
    """Eval-mode BatchNorm folded into the preceding Linear: y = (xW+b)*s + t."""
    gamma, beta, mean, var = bn
    scale = gamma * lax.rsqrt(var + BN_EPS)          # (1, out)
    shift = beta - mean * scale
    w_f = (w.astype(jnp.float32) * scale).astype(jnp.bfloat16)
    b_f = b * scale + shift
    return w_f, b_f


@functools.partial(jax.jit,
                   static_argnames=("latent_dim", "force_streamed", "tile_k"))
def encoder_forward(img, params, *, latent_dim, force_streamed=False, tile_k=None):
    """img: (B, C, H, W) float32 NCHW.  Returns (z_content (B, L-1), z_rot (B, 1))."""
    B = img.shape[0]
    x = img.reshape(B, -1)                 # stays f32; cast to bf16 inside kernel
    D = x.shape[1]
    L = latent_dim
    L_pad = _round_up(max(L, 128), 128)    # lane-dense output store

    # ---- batch tiling ----------------------------------------------------
    if B < 256:
        TILE_B = B                         # single tile, block == full dim, no pad
    elif B < 1024:
        TILE_B = 256
    else:
        TILE_B = 512                       # >= 2 batch tiles -> both v7x TCs busy
    B_pad = _round_up(B, TILE_B)
    nb = B_pad // TILE_B
    if B_pad != B:
        x = jnp.pad(x, ((0, B_pad - B), (0, 0)))   # zero rows, sliced away later

    # ---- fold BN into w2/b2, w3/b3; pad final layer to lane width ---------
    w1 = params["w1"]
    b1 = params["b1"]
    w2f, b2f = _fold_bn_into_linear(params["w2"], params["b2"], params["bn2"])
    w3f, b3f = _fold_bn_into_linear(params["w3"], params["b3"], params["bn3"])
    w4 = jnp.pad(params["w4"], ((0, 0), (0, L_pad - L)))
    b4 = jnp.pad(params["b4"], ((0, 0), (0, L_pad - L)))

    # ---- VMEM footprint (double-buffered inputs + cast temp + output) -----
    small_bytes = 2 * ((512 * 256 + 256 * 128 + 128 * L_pad) * 2
                       + (512 + 256 + 128 + L_pad) * 4)
    out_bytes = 2 * TILE_B * L_pad * 4
    flops = 2 * B_pad * (D * 512 + 512 * 256 + 256 * 128 + 128 * L_pad)

    resident_need = (2 * TILE_B * D * 4        # x tiles (f32)
                     + TILE_B * D * 2          # in-kernel bf16 cast temporary
                     + 2 * D * 512 * 2         # resident w1 (bf16)
                     + small_bytes + out_bytes)
    RESIDENT_CAP = 40 * 1024 * 1024            # conservative vs v7x 64 MiB VMEM
    use_resident = (resident_need <= RESIDENT_CAP) and (not force_streamed)

    MIB = 1024 * 1024

    if use_resident:
        vmem_limit = int(min(56 * MIB, max(32 * MIB, resident_need + 8 * MIB)))
        cost = pl.CostEstimate(
            flops=flops, transcendentals=0,
            bytes_accessed=(B_pad * D * 4 + D * 512 * 2
                            + small_bytes // 2 + B_pad * L_pad * 4))
        res = lambda b: (0, 0)     # full-array block, resident across grid steps

        z_full = pl.pallas_call(
            _encoder_kernel_resident,
            out_shape=jax.ShapeDtypeStruct((B_pad, L_pad), jnp.float32),
            grid_spec=pltpu.PrefetchScalarGridSpec(
                num_scalar_prefetch=0,
                grid=(nb,),
                in_specs=[
                    pl.BlockSpec((TILE_B, D), lambda b: (b, 0)),  # x (f32)
                    pl.BlockSpec((D, 512), res),                  # w1 (resident)
                    pl.BlockSpec((1, 512), res),                  # b1
                    pl.BlockSpec((512, 256), res),                # w2 (BN folded)
                    pl.BlockSpec((1, 256), res),                  # b2 (BN folded)
                    pl.BlockSpec((256, 128), res),                # w3 (BN folded)
                    pl.BlockSpec((1, 128), res),                  # b3 (BN folded)
                    pl.BlockSpec((128, L_pad), res),              # w4 (padded)
                    pl.BlockSpec((1, L_pad), res),                # b4 (padded)
                ],
                out_specs=pl.BlockSpec((TILE_B, L_pad), lambda b: (b, 0)),
            ),
            compiler_params=pltpu.CompilerParams(
                dimension_semantics=("parallel",),
                vmem_limit_bytes=vmem_limit),
            cost_estimate=cost,
        )(x, w1, b1, w2f, b2f, w3f, b3f, w4, b4)
    else:
        # K-streamed fallback for very large D (w1 doesn't fit the VMEM budget).
        TILE_K = tile_k if tile_k is not None else (
            2048 if D >= 2048 else _round_up(D, 512))
        D_pad = _round_up(D, TILE_K)
        nk = D_pad // TILE_K
        if D_pad != D:
            x = jnp.pad(x, ((0, 0), (0, D_pad - D)))
            w1 = jnp.pad(w1, ((0, D_pad - D), (0, 0)))

        streamed_need = (2 * TILE_B * TILE_K * 4 + TILE_B * TILE_K * 2
                         + 2 * TILE_K * 512 * 2 + TILE_B * 512 * 4
                         + small_bytes + out_bytes)
        vmem_limit = int(min(56 * MIB, max(32 * MIB, streamed_need + 8 * MIB)))
        cost = pl.CostEstimate(
            flops=flops, transcendentals=0,
            bytes_accessed=(B_pad * D_pad * 4 + nb * D_pad * 512 * 2
                            + small_bytes // 2 + B_pad * L_pad * 4))
        res2 = lambda b, k: (0, 0)

        z_full = pl.pallas_call(
            _encoder_kernel_streamed,
            out_shape=jax.ShapeDtypeStruct((B_pad, L_pad), jnp.float32),
            grid_spec=pltpu.PrefetchScalarGridSpec(
                num_scalar_prefetch=0,
                grid=(nb, nk),
                in_specs=[
                    pl.BlockSpec((TILE_B, TILE_K), lambda b, k: (b, k)),  # x
                    pl.BlockSpec((TILE_K, 512), lambda b, k: (k, 0)),     # w1
                    pl.BlockSpec((1, 512), res2),        # b1
                    pl.BlockSpec((512, 256), res2),      # w2 (BN folded)
                    pl.BlockSpec((1, 256), res2),        # b2 (BN folded)
                    pl.BlockSpec((256, 128), res2),      # w3 (BN folded)
                    pl.BlockSpec((1, 128), res2),        # b3 (BN folded)
                    pl.BlockSpec((128, L_pad), res2),    # w4 (padded)
                    pl.BlockSpec((1, L_pad), res2),      # b4 (padded)
                ],
                out_specs=pl.BlockSpec((TILE_B, L_pad), lambda b, k: (b, 0)),
                scratch_shapes=[pltpu.VMEM((TILE_B, 512), jnp.float32)],
            ),
            compiler_params=pltpu.CompilerParams(
                dimension_semantics=("parallel", "arbitrary"),
                vmem_limit_bytes=vmem_limit),
            cost_estimate=cost,
        )(x, w1, b1, w2f, b2f, w3f, b3f, w4, b4)

    z = z_full[:B, :L]
    return z[:, : L - 1], z[:, L - 1:]


def init_params(key, in_features, latent_dim):
    """nn.Linear-style init; weights stored (in, out) bf16, biases (1, out) f32.
    BatchNorm params mimic trained running statistics (eval mode)."""

    def linear(k, fan_in, fan_out):
        kw, kb = jax.random.split(k)
        bound = 1.0 / np.sqrt(fan_in)
        w = jax.random.uniform(kw, (fan_in, fan_out), jnp.float32, -bound, bound)
        b = jax.random.uniform(kb, (1, fan_out), jnp.float32, -bound, bound)
        return w.astype(jnp.bfloat16), b

    def batchnorm(k, feat):
        kg, kb, km, kv = jax.random.split(k, 4)
        gamma = 1.0 + 0.1 * jax.random.uniform(kg, (1, feat), jnp.float32, -1.0, 1.0)
        beta = 0.1 * jax.random.normal(kb, (1, feat), jnp.float32)
        mean = 0.1 * jax.random.normal(km, (1, feat), jnp.float32)
        var = 1.0 + 0.1 * jax.random.uniform(kv, (1, feat), jnp.float32, 0.0, 1.0)
        return gamma, beta, mean, var

    k1, k2, k3, k4, kb2, kb3 = jax.random.split(key, 6)
    w1, b1 = linear(k1, in_features, 512)
    w2, b2 = linear(k2, 512, 256)
    w3, b3 = linear(k3, 256, 128)
    w4, b4 = linear(k4, 128, latent_dim)
    return dict(w1=w1, b1=b1,
                w2=w2, b2=b2, bn2=batchnorm(kb2, 256),
                w3=w3, b3=b3, bn3=batchnorm(kb3, 128),
                w4=w4, b4=b4)


def _reference_forward(img, params, latent_dim):
    """Pure-JAX reference with the same bf16-weight / f32-accumulate numerics.
    Uses the same eval-mode BN folding (mathematically identical to applying
    BatchNorm1d with running statistics after the Linear)."""
    B = img.shape[0]
    x = img.reshape(B, -1).astype(jnp.bfloat16)
    f32 = jnp.float32

    w2f, b2f = _fold_bn_into_linear(params["w2"], params["b2"], params["bn2"])
    w3f, b3f = _fold_bn_into_linear(params["w3"], params["b3"], params["bn3"])

    h1 = _leaky(jnp.dot(x, params["w1"], preferred_element_type=f32) + params["b1"])
    h2 = _leaky(jnp.dot(h1.astype(jnp.bfloat16), w2f, preferred_element_type=f32) + b2f)
    h3 = _leaky(jnp.dot(h2.astype(jnp.bfloat16), w3f, preferred_element_type=f32) + b3f)
    z = jnp.dot(h3.astype(jnp.bfloat16), params["w4"],
                preferred_element_type=f32) + params["b4"]
    return z[:, : latent_dim - 1], z[:, latent_dim - 1:]


if __name__ == "__main__":
    key = jax.random.PRNGKey(0)
    k_img, k_params = jax.random.split(key)

    # Small NCHW image: batch=2, channels=4, spatial=16x16 -> D = 1024
    B, C, H, W = 2, 4, 16, 16
    latent_dim = 16
    img = jax.random.normal(k_img, (B, C, H, W), jnp.float32)
    params = init_params(k_params, C * H * W, latent_dim)

    ref_content, ref_rot = _reference_forward(img, params, latent_dim)

    # Resident-w1 fast path (default at this size).
    z_content, z_rot = encoder_forward(img, params, latent_dim=latent_dim)
    z_content, z_rot = jax.block_until_ready((z_content, z_rot))
    assert z_content.shape == (B, latent_dim - 1), z_content.shape
    assert z_rot.shape == (B, 1), z_rot.shape
    assert jnp.allclose(z_content, ref_content, atol=5e-3, rtol=5e-3)
    assert jnp.allclose(z_rot, ref_rot, atol=5e-3, rtol=5e-3)

    # K-streamed fallback path (exercised explicitly with a small TILE_K so the
    # accumulator / pl.when epilogue logic is validated too).
    z_content2, z_rot2 = encoder_forward(img, params, latent_dim=latent_dim,
                                         force_streamed=True, tile_k=512)
    z_content2, z_rot2 = jax.block_until_ready((z_content2, z_rot2))
    assert jnp.allclose(z_content2, ref_content, atol=5e-3, rtol=5e-3)
    assert jnp.allclose(z_rot2, ref_rot, atol=5e-3, rtol=5e-3)

    print("KERNEL_OK")
</pallas_src>

<mosaic_0001>
module attributes {stable_mosaic.version = 11 : i64} {
  func.func @_encoder_kernel_resident(%arg0: i32, %arg1: memref<2x1024xf32, #tpu.memory_space<vmem>>, %arg2: memref<1024x512xbf16, #tpu.memory_space<vmem>>, %arg3: memref<1x512xf32, #tpu.memory_space<vmem>>, %arg4: memref<512x256xbf16, #tpu.memory_space<vmem>>, %arg5: memref<1x256xf32, #tpu.memory_space<vmem>>, %arg6: memref<256x128xbf16, #tpu.memory_space<vmem>>, %arg7: memref<1x128xf32, #tpu.memory_space<vmem>>, %arg8: memref<128x128xbf16, #tpu.memory_space<vmem>>, %arg9: memref<1x128xf32, #tpu.memory_space<vmem>>, %arg10: memref<2x128xf32, #tpu.memory_space<vmem>>) attributes {dimension_semantics = [#tpu.dimension_semantics<parallel>], iteration_bounds = array<i64: 1>, scalar_prefetch = 0 : i64, scratch_operands = 0 : i64, tpu.core_type = #tpu.core_type<tc>, window_params = [{transform_indices = @transform_0, window_bounds = array<i64: 2, 1024>}, {pipeline_mode = #tpu.pipeline_mode<synchronous>, transform_indices = @transform_1, window_bounds = array<i64: 1024, 512>}, {pipeline_mode = #tpu.pipeline_mode<synchronous>, transform_indices = @transform_2, window_bounds = array<i64: 1, 512>}, {pipeline_mode = #tpu.pipeline_mode<synchronous>, transform_indices = @transform_3, window_bounds = array<i64: 512, 256>}, {pipeline_mode = #tpu.pipeline_mode<synchronous>, transform_indices = @transform_4, window_bounds = array<i64: 1, 256>}, {pipeline_mode = #tpu.pipeline_mode<synchronous>, transform_indices = @transform_5, window_bounds = array<i64: 256, 128>}, {pipeline_mode = #tpu.pipeline_mode<synchronous>, transform_indices = @transform_6, window_bounds = array<i64: 1, 128>}, {pipeline_mode = #tpu.pipeline_mode<synchronous>, transform_indices = @transform_7, window_bounds = array<i64: 128, 128>}, {pipeline_mode = #tpu.pipeline_mode<synchronous>, transform_indices = @transform_8, window_bounds = array<i64: 1, 128>}, {transform_indices = @transform_9, window_bounds = array<i64: 2, 128>}]} {
    %c0 = arith.constant 0 : index
    %c0_0 = arith.constant 0 : index
    %0 = vector.load %arg1[%c0, %c0_0] : memref<2x1024xf32, #tpu.memory_space<vmem>>, vector<2x1024xf32>
    %1 = arith.truncf %0 : vector<2x1024xf32> to vector<2x1024xbf16>
    %c0_1 = arith.constant 0 : index
    %c0_2 = arith.constant 0 : index
    %2 = vector.load %arg2[%c0_1, %c0_2] : memref<1024x512xbf16, #tpu.memory_space<vmem>>, vector<1024x512xbf16>
    %cst = arith.constant dense<0.000000e+00> : vector<2x512xf32>
    %3 = tpu.matmul %1, %2, %cst {dimension_numbers = #tpu.dot_dimension_numbers<[1], [0], [0], [1], [0, 0, 1, 1], [], []>} : vector<2x1024xbf16>, vector<1024x512xbf16>, vector<2x512xf32> -> vector<2x512xf32>
    %c0_3 = arith.constant 0 : index
    %c0_4 = arith.constant 0 : index
    %4 = vector.load %arg3[%c0_3, %c0_4] : memref<1x512xf32, #tpu.memory_space<vmem>>, vector<1x512xf32>
    %5 = vector.broadcast %4 : vector<1x512xf32> to vector<2x512xf32>
    %6 = arith.addf %3, %5 : vector<2x512xf32>
    %cst_5 = arith.constant 2.000000e-01 : f32
    %7 = vector.broadcast %cst_5 : f32 to vector<2x512xf32>
    %8 = arith.mulf %7, %6 : vector<2x512xf32>
    %9 = arith.maximumf %6, %8 : vector<2x512xf32>
    %10 = arith.truncf %9 : vector<2x512xf32> to vector<2x512xbf16>
    %c0_6 = arith.constant 0 : index
    %c0_7 = arith.constant 0 : index
    %11 = vector.load %arg4[%c0_6, %c0_7] : memref<512x256xbf16, #tpu.memory_space<vmem>>, vector<512x256xbf16>
    %cst_8 = arith.constant dense<0.000000e+00> : vector<2x256xf32>
    %12 = tpu.matmul %10, %11, %cst_8 {dimension_numbers = #tpu.dot_dimension_numbers<[1], [0], [0], [1], [0, 0, 1, 1], [], []>} : vector<2x512xbf16>, vector<512x256xbf16>, vector<2x256xf32> -> vector<2x256xf32>
    %c0_9 = arith.constant 0 : index
    %c0_10 = arith.constant 0 : index
    %13 = vector.load %arg5[%c0_9, %c0_10] : memref<1x256xf32, #tpu.memory_space<vmem>>, vector<1x256xf32>
    %14 = vector.broadcast %13 : vector<1x256xf32> to vector<2x256xf32>
    %15 = arith.addf %12, %14 : vector<2x256xf32>
    %cst_11 = arith.constant 2.000000e-01 : f32
    %16 = vector.broadcast %cst_11 : f32 to vector<2x256xf32>
    %17 = arith.mulf %16, %15 : vector<2x256xf32>
    %18 = arith.maximumf %15, %17 : vector<2x256xf32>
    %19 = arith.truncf %18 : vector<2x256xf32> to vector<2x256xbf16>
    %c0_12 = arith.constant 0 : index
    %c0_13 = arith.constant 0 : index
    %20 = vector.load %arg6[%c0_12, %c0_13] : memref<256x128xbf16, #tpu.memory_space<vmem>>, vector<256x128xbf16>
    %cst_14 = arith.constant dense<0.000000e+00> : vector<2x128xf32>
    %21 = tpu.matmul %19, %20, %cst_14 {dimension_numbers = #tpu.dot_dimension_numbers<[1], [0], [0], [1], [0, 0, 1, 1], [], []>} : vector<2x256xbf16>, vector<256x128xbf16>, vector<2x128xf32> -> vector<2x128xf32>
    %c0_15 = arith.constant 0 : index
    %c0_16 = arith.constant 0 : index
    %22 = vector.load %arg7[%c0_15, %c0_16] : memref<1x128xf32, #tpu.memory_space<vmem>>, vector<1x128xf32>
    %23 = vector.broadcast %22 : vector<1x128xf32> to vector<2x128xf32>
    %24 = arith.addf %21, %23 : vector<2x128xf32>
    %cst_17 = arith.constant 2.000000e-01 : f32
    %25 = vector.broadcast %cst_17 : f32 to vector<2x128xf32>
    %26 = arith.mulf %25, %24 : vector<2x128xf32>
    %27 = arith.maximumf %24, %26 : vector<2x128xf32>
    %28 = arith.truncf %27 : vector<2x128xf32> to vector<2x128xbf16>
    %c0_18 = arith.constant 0 : index
    %c0_19 = arith.constant 0 : index
    %29 = vector.load %arg8[%c0_18, %c0_19] : memref<128x128xbf16, #tpu.memory_space<vmem>>, vector<128x128xbf16>
    %cst_20 = arith.constant dense<0.000000e+00> : vector<2x128xf32>
    %30 = tpu.matmul %28, %29, %cst_20 {dimension_numbers = #tpu.dot_dimension_numbers<[1], [0], [0], [1], [0, 0, 1, 1], [], []>} : vector<2x128xbf16>, vector<128x128xbf16>, vector<2x128xf32> -> vector<2x128xf32>
    %c0_21 = arith.constant 0 : index
    %c0_22 = arith.constant 0 : index
    %31 = vector.load %arg9[%c0_21, %c0_22] : memref<1x128xf32, #tpu.memory_space<vmem>>, vector<1x128xf32>
    %32 = vector.broadcast %31 : vector<1x128xf32> to vector<2x128xf32>
    %33 = arith.addf %30, %32 : vector<2x128xf32>
    %c0_23 = arith.constant 0 : index
    %c0_24 = arith.constant 0 : index
    %34 = vector.load %arg10[%c0_23, %c0_24] : memref<2x128xf32, #tpu.memory_space<vmem>>, vector<2x128xf32>
    tpu.vector_store %arg10[%c0_23, %c0_24], %33 {strides = array<i32>} : memref<2x128xf32, #tpu.memory_space<vmem>>, vector<2x128xf32>,
    return
  }
  func.func @transform_0(%arg0: i32) -> (i32, i32) {
    %c0_i32 = arith.constant 0 : i32
    %c0_i32_0 = arith.constant 0 : i32
    return %arg0, %c0_i32 : i32, i32
  }
  func.func @transform_1(%arg0: i32) -> (i32, i32) {
    %c0_i32 = arith.constant 0 : i32
    %c0_i32_0 = arith.constant 0 : i32
    %c0_i32_1 = arith.constant 0 : i32
    return %c0_i32, %c0_i32_0 : i32, i32
  }
  func.func @transform_2(%arg0: i32) -> (i32, i32) {
    %c0_i32 = arith.constant 0 : i32
    %c0_i32_0 = arith.constant 0 : i32
    %c0_i32_1 = arith.constant 0 : i32
    return %c0_i32, %c0_i32_0 : i32, i32
  }
  func.func @transform_3(%arg0: i32) -> (i32, i32) {
    %c0_i32 = arith.constant 0 : i32
    %c0_i32_0 = arith.constant 0 : i32
    %c0_i32_1 = arith.constant 0 : i32
    return %c0_i32, %c0_i32_0 : i32, i32
  }
  func.func @transform_4(%arg0: i32) -> (i32, i32) {
    %c0_i32 = arith.constant 0 : i32
    %c0_i32_0 = arith.constant 0 : i32
    %c0_i32_1 = arith.constant 0 : i32
    return %c0_i32, %c0_i32_0 : i32, i32
  }
  func.func @transform_5(%arg0: i32) -> (i32, i32) {
    %c0_i32 = arith.constant 0 : i32
    %c0_i32_0 = arith.constant 0 : i32
    %c0_i32_1 = arith.constant 0 : i32
    return %c0_i32, %c0_i32_0 : i32, i32
  }
  func.func @transform_6(%arg0: i32) -> (i32, i32) {
    %c0_i32 = arith.constant 0 : i32
    %c0_i32_0 = arith.constant 0 : i32
    %c0_i32_1 = arith.constant 0 : i32
    return %c0_i32, %c0_i32_0 : i32, i32
  }
  func.func @transform_7(%arg0: i32) -> (i32, i32) {
    %c0_i32 = arith.constant 0 : i32
    %c0_i32_0 = arith.constant 0 : i32
    %c0_i32_1 = arith.constant 0 : i32
    return %c0_i32, %c0_i32_0 : i32, i32
  }
  func.func @transform_8(%arg0: i32) -> (i32, i32) {
    %c0_i32 = arith.constant 0 : i32
    %c0_i32_0 = arith.constant 0 : i32
    %c0_i32_1 = arith.constant 0 : i32
    return %c0_i32, %c0_i32_0 : i32, i32
  }
  func.func @transform_9(%arg0: i32) -> (i32, i32) {
    %c0_i32 = arith.constant 0 : i32
    %c0_i32_0 = arith.constant 0 : i32
    return %arg0, %c0_i32 : i32, i32
  }
}

</mosaic_0001>

<llo_original>
// kernel: encoder_forward.1
$region0: #{encoder_forward.1}
  #allocation0 [shape = 'u32[]', space=smem, size = 0x4, offset = 0x4, fixed_abs, tag = 'smem constant byte address 0x4 - core index']
  #allocation1 [shape = 'u32[72,128]{1,0:T(1,128)}', space=vmem, size = 0x9000, scoped, tag = 'internal scratch']
  %s0 = inlined_call_operand.vmem [shape: f32[2,1024], index: 0, kind: input, shape index: {}]
  %s1 = inlined_call_operand.hbm [shape: bf16[1024,512], index: 1, kind: input, shape index: {}]
  %s2 = inlined_call_operand.vmem [shape: f32[1,512], index: 2, kind: input, shape index: {}]
  %s3 = inlined_call_operand.vmem [shape: bf16[512,256], index: 3, kind: input, shape index: {}]
  %s4 = inlined_call_operand.vmem [shape: f32[1,256], index: 4, kind: input, shape index: {}]
  %s5 = inlined_call_operand.vmem [shape: bf16[256,128], index: 5, kind: input, shape index: {}]
  %s6 = inlined_call_operand.vmem [shape: f32[1,128], index: 6, kind: input, shape index: {}]
  %s7 = inlined_call_operand.vmem [shape: bf16[128,128], index: 7, kind: input, shape index: {}]
  %s8 = inlined_call_operand.vmem [shape: f32[1,128], index: 8, kind: input, shape index: {}]
  %s9 = inlined_call_operand.vmem [shape: f32[2,128], index: 9, kind: output, shape index: {}]
  %s10 = sld [smem:[#allocation0]]
  $region50: #{encoder_forward.1} parent=0
    _
  %s12 = ssub.s32 1, %s10
  %s13 = scalar_select 0, %s12, %s10
  $region1: #{encoder_forward.1} parent=0
    #allocation2 [shape = 'u8[1048576]{0}', space=vmem, size = 0x100000, scoped, tag = 'input window, operand 1, single buffered']
    #allocation3 [shape = 's32[1]{0}', space=sflag, size = 0x4, scoped, tag = 'scoped memory for encoder_forward.1']
    %14 = vsyncpa [#allocation3], 0
    // Predicated region
    $region2: #{encoder_forward.1} parent=1 // pred_check
      _
    $region3: #{encoder_forward.1} parent=1 // pred_check_branch
      %16 = sbr.rel (0) target = $region5
    $region4: #{encoder_forward.1} parent=1 // pred_region
      _
    $region5: #{encoder_forward.1} parent=1 // pred_fallthru
      _
    // Predicated region
    $region6: #{encoder_forward.1} parent=1 // pred_check
      _
    $region7: #{encoder_forward.1} parent=1 // pred_check_branch
      %18 = sbr.rel (0) target = $region9
    $region8: #{encoder_forward.1} parent=1 // pred_region
      %20 = vsyncadd [#allocation3], 0
      %s21 = sshll.u32 %s1, 4
      %s22 = int_to_ptr.hbm [resolvable:$true] %s21
      %s23 = sshll.u32 [#allocation2], 4
      %s24 = int_to_ptr.vmem [resolvable:$true] %s23
      %29 = dma.hbm_to_vmem [thread:$0]  %s22, 32768, %s24, [#allocation3], 256, 256, 16
    $region9: #{encoder_forward.1} parent=1 // pred_fallthru
      _
    // Predicated region
    $region10: #{encoder_forward.1} parent=1 // pred_check
      _
    $region11: #{encoder_forward.1} parent=1 // pred_check_branch
      %31 = sbr.rel (0) target = $region13
    $region12: #{encoder_forward.1} parent=1 // pred_region
      _
    $region13: #{encoder_forward.1} parent=1 // pred_fallthru
      _
    // Predicated region
    $region14: #{encoder_forward.1} parent=1 // pred_check
      _
    $region15: #{encoder_forward.1} parent=1 // pred_check_branch
      %33 = sbr.rel (0) target = $region17
    $region16: #{encoder_forward.1} parent=1 // pred_region
      _
    $region17: #{encoder_forward.1} parent=1 // pred_fallthru
      _
    // Predicated region
    $region18: #{encoder_forward.1} parent=1 // pred_check
      _
    $region19: #{encoder_forward.1} parent=1 // pred_check_branch
      %35 = sbr.rel (0) target = $region21
    $region20: #{encoder_forward.1} parent=1 // pred_region
      _
    $region21: #{encoder_forward.1} parent=1 // pred_fallthru
      _
    // Predicated region
    $region22: #{encoder_forward.1} parent=1 // pred_check
      _
    $region23: #{encoder_forward.1} parent=1 // pred_check_branch
      %37 = sbr.rel (0) target = $region25
    $region24: #{encoder_forward.1} parent=1 // pred_region
      _
    $region25: #{encoder_forward.1} parent=1 // pred_fallthru
      _
    // Predicated region
    $region26: #{encoder_forward.1} parent=1 // pred_check
      _
    $region27: #{encoder_forward.1} parent=1 // pred_check_branch
      %39 = sbr.rel (0) target = $region29
    $region28: #{encoder_forward.1} parent=1 // pred_region
      _
    $region29: #{encoder_forward.1} parent=1 // pred_fallthru
      _
    // Predicated region
    $region30: #{encoder_forward.1} parent=1 // pred_check
      _
    $region31: #{encoder_forward.1} parent=1 // pred_check_branch
      %41 = sbr.rel (0) target = $region33
    $region32: #{encoder_forward.1} parent=1 // pred_region
      _
    $region33: #{encoder_forward.1} parent=1 // pred_fallthru
      _
    // Predicated region
    $region34: #{encoder_forward.1} parent=1 // pred_check
      _
    $region35: #{encoder_forward.1} parent=1 // pred_check_branch
      %43 = sbr.rel (0) target = $region37
    $region36: #{encoder_forward.1} parent=1 // pred_region
      _
    $region37: #{encoder_forward.1} parent=1 // pred_fallthru
      _
    // Predicated region
    $region38: #{encoder_forward.1} parent=1 // pred_check
      _
    $region39: #{encoder_forward.1} parent=1 // pred_check_branch
      %45 = sbr.rel (0) target = $region41
    $region40: #{encoder_forward.1} parent=1 // pred_region
      %47 = dma.done [#allocation3], 32768
    $region41: #{encoder_forward.1} parent=1 // pred_fallthru
      _
    %v48 = vld [vmem:[%s0] sm:$0xff]
    %v49 = vld [vmem:[%s0 + $0x8] sm:$0xff]
    %52 = vst [vmem:[#allocation1] ss:$4 sm:$0xff] %v48
    %s53 = scalar_lea.vmem [#allocation1], 32
    %54 = vst [vmem:[%s53] ss:$4 sm:$0xff] %v49
    %v55 = vld.sshfl [vmem:[#allocation1] sm:$0xff pattern:$0x73625140]
    %v56 = vld.sshfl [vmem:[#allocation1 + $0x8] sm:$0xff pattern:$0x73625140]
    %v57 = vld.sshfl [vmem:[#allocation1 + $0x10] sm:$0xff pattern:$0x73625140]
    %v58 = vld.sshfl [vmem:[#allocation1 + $0x18] sm:$0xff pattern:$0x73625140]
    %v59 = vld.sshfl [vmem:[#allocation1 + $0x20] sm:$0xff pattern:$0x73625140]
    %v60 = vld.sshfl [vmem:[#allocation1 + $0x28] sm:$0xff pattern:$0x73625140]
    %v61 = vld.sshfl [vmem:[#allocation1 + $0x30] sm:$0xff pattern:$0x73625140]
    %v62 = vld.sshfl [vmem:[#allocation1 + $0x38] sm:$0xff pattern:$0x73625140]
    %v71 = vpack.c.bf16 %v55, %v55
    %v72 = vpack.c.bf16 %v56, %v56
    %v73 = vpack.c.bf16 %v57, %v57
    %v74 = vpack.c.bf16 %v58, %v58
    %v75 = vpack.c.bf16 %v59, %v59
    %v76 = vpack.c.bf16 %v60, %v60
    %v77 = vpack.c.bf16 %v61, %v61
    %v78 = vpack.c.bf16 %v62, %v62
    %v79 = vld [vmem:[#allocation2] sm:$0xff]
    %v80 = vld [vmem:[#allocation2 + $0x8] sm:$0xff]
    %v81 = vld [vmem:[#allocation2 + $0x10] sm:$0xff]
    %v82 = vld [vmem:[#allocation2 + $0x18] sm:$0xff]
    %v83 = vld [vmem:[#allocation2 + $0x20] sm:$0xff]
    %v84 = vld [vmem:[#allocation2 + $0x28] sm:$0xff]
    %v85 = vld [vmem:[#allocation2 + $0x30] sm:$0xff]
    %v86 = vld [vmem:[#allocation2 + $0x38] sm:$0xff]
    %v87 = vld [vmem:[#allocation2 + $0x40] sm:$0xff]
    %v88 = vld [vmem:[#allocation2 + $0x48] sm:$0xff]
    %v89 = vld [vmem:[#allocation2 + $0x50] sm:$0xff]
    %v90 = vld [vmem:[#allocation2 + $0x58] sm:$0xff]
    %v91 = vld [vmem:[#allocation2 + $0x60] sm:$0xff]
    %v92 = vld [vmem:[#allocation2 + $0x68] sm:$0xff]
    %v93 = vld [vmem:[#allocation2 + $0x70] sm:$0xff]
    %v94 = vld [vmem:[#allocation2 + $0x78] sm:$0xff]
    %v95 = vld [vmem:[#allocation2 + $0x80] sm:$0xff]
    %v96 = vld [vmem:[#allocation2 + $0x88] sm:$0xff]
    %v97 = vld [vmem:[#allocation2 + $0x90] sm:$0xff]
    %v98 = vld [vmem:[#allocation2 + $0x98] sm:$0xff]
    %v99 = vld [vmem:[#allocation2 + $0xa0] sm:$0xff]
    %v100 = vld [vmem:[#allocation2 + $0xa8] sm:$0xff]
    %v101 = vld [vmem:[#allocation2 + $0xb0] sm:$0xff]
    %v102 = vld [vmem:[#allocation2 + $0xb8] sm:$0xff]
    %v103 = vld [vmem:[#allocation2 + $0xc0] sm:$0xff]
    %v104 = vld [vmem:[#allocation2 + $0xc8] sm:$0xff]
    %v105 = vld [vmem:[#allocation2 + $0xd0] sm:$0xff]
    %v106 = vld [vmem:[#allocation2 + $0xd8] sm:$0xff]
    %v107 = vld [vmem:[#allocation2 + $0xe0] sm:$0xff]
    %v108 = vld [vmem:[#allocation2 + $0xe8] sm:$0xff]
    %v109 = vld [vmem:[#allocation2 + $0xf0] sm:$0xff]
    %v110 = vld [vmem:[#allocation2 + $0xf8] sm:$0xff]
    %v111 = vld [vmem:[#allocation2 + $0x100] sm:$0xff]
    %v112 = vld [vmem:[#allocation2 + $0x108] sm:$0xff]
    %v113 = vld [vmem:[#allocation2 + $0x110] sm:$0xff]
    %v114 = vld [vmem:[#allocation2 + $0x118] sm:$0xff]
    %v115 = vld [vmem:[#allocation2 + $0x120] sm:$0xff]
    %v116 = vld [vmem:[#allocation2 + $0x128] sm:$0xff]
    %v117 = vld [vmem:[#allocation2 + $0x130] sm:$0xff]
    %v118 = vld [vmem:[#allocation2 + $0x138] sm:$0xff]
    %v119 = vld [vmem:[#allocation2 + $0x140] sm:$0xff]
    %v120 = vld [vmem:[#allocation2 + $0x148] sm:$0xff]
    %v121 = vld [vmem:[#allocation2 + $0x150] sm:$0xff]
    %v122 = vld [vmem:[#allocation2 + $0x158] sm:$0xff]
    %v123 = vld [vmem:[#allocation2 + $0x160] sm:$0xff]
    %v124 = vld [vmem:[#allocation2 + $0x168] sm:$0xff]
    %v125 = vld [vmem:[#allocation2 + $0x170] sm:$0xff]
    %v126 = vld [vmem:[#allocation2 + $0x178] sm:$0xff]
    %v127 = vld [vmem:[#allocation2 + $0x180] sm:$0xff]
    %v128 = vld [vmem:[#allocation2 + $0x188] sm:$0xff]
    %v129 = vld [vmem:[#allocation2 + $0x190] sm:$0xff]
    %v130 = vld [vmem:[#allocation2 + $0x198] sm:$0xff]
    %v131 = vld [vmem:[#allocation2 + $0x1a0] sm:$0xff]
    %v132 = vld [vmem:[#allocation2 + $0x1a8] sm:$0xff]
    %v133 = vld [vmem:[#allocation2 + $0x1b0] sm:$0xff]
    %v134 = vld [vmem:[#allocation2 + $0x1b8] sm:$0xff]
    %v135 = vld [vmem:[#allocation2 + $0x1c0] sm:$0xff]
    %v136 = vld [vmem:[#allocation2 + $0x1c8] sm:$0xff]
    %v137 = vld [vmem:[#allocation2 + $0x1d0] sm:$0xff]
    %v138 = vld [vmem:[#allocation2 + $0x1d8] sm:$0xff]
    %v139 = vld [vmem:[#allocation2 + $0x1e0] sm:$0xff]
    %v140 = vld [vmem:[#allocation2 + $0x1e8] sm:$0xff]
    %v141 = vld [vmem:[#allocation2 + $0x1f0] sm:$0xff]
    %v142 = vld [vmem:[#allocation2 + $0x1f8] sm:$0xff]
    %v143 = vld [vmem:[#allocation2 + $0x200] sm:$0xff]
    %v144 = vld [vmem:[#allocation2 + $0x208] sm:$0xff]
    %v145 = vld [vmem:[#allocation2 + $0x210] sm:$0xff]
    %v146 = vld [vmem:[#allocation2 + $0x218] sm:$0xff]
    %v147 = vld [vmem:[#allocation2 + $0x220] sm:$0xff]
    %v148 = vld [vmem:[#allocation2 + $0x228] sm:$0xff]
    %v149 = vld [vmem:[#allocation2 + $0x230] sm:$0xff]
    %v150 = vld [vmem:[#allocation2 + $0x238] sm:$0xff]
    %v151 = vld [vmem:[#allocation2 + $0x240] sm:$0xff]
    %v152 = vld [vmem:[#allocation2 + $0x248] sm:$0xff]
    %v153 = vld [vmem:[#allocation2 + $0x250] sm:$0xff]
    %v154 = vld [vmem:[#allocation2 + $0x258] sm:$0xff]
    %v155 = vld [vmem:[#allocation2 + $0x260] sm:$0xff]
    %v156 = vld [vmem:[#allocation2 + $0x268] sm:$0xff]
    %v157 = vld [vmem:[#allocation2 + $0x270] sm:$0xff]
    %v158 = vld [vmem:[#allocation2 + $0x278] sm:$0xff]
    %v159 = vld [vmem:[#allocation2 + $0x280] sm:$0xff]
    %v160 = vld [vmem:[#allocation2 + $0x288] sm:$0xff]
    %v161 = vld [vmem:[#allocation2 + $0x290] sm:$0xff]
    %v162 = vld [vmem:[#allocation2 + $0x298] sm:$0xff]
    %v163 = vld [vmem:[#allocation2 + $0x2a0] sm:$0xff]
    %v164 = vld [vmem:[#allocation2 + $0x2a8] sm:$0xff]
    %v165 = vld [vmem:[#allocation2 + $0x2b0] sm:$0xff]
    %v166 = vld [vmem:[#allocation2 + $0x2b8] sm:$0xff]
    %v167 = vld [vmem:[#allocation2 + $0x2c0] sm:$0xff]
    %v168 = vld [vmem:[#allocation2 + $0x2c8] sm:$0xff]
    %v169 = vld [vmem:[#allocation2 + $0x2d0] sm:$0xff]
    %v170 = vld [vmem:[#allocation2 + $0x2d8] sm:$0xff]
    %v171 = vld [vmem:[#allocation2 + $0x2e0] sm:$0xff]
    %v172 = vld [vmem:[#allocation2 + $0x2e8] sm:$0xff]
    %v173 = vld [vmem:[#allocation2 + $0x2f0] sm:$0xff]
    %v174 = vld [vmem:[#allocation2 + $0x2f8] sm:$0xff]
    %v175 = vld [vmem:[#allocation2 + $0x300] sm:$0xff]
    %v176 = vld [vmem:[#allocation2 + $0x308] sm:$0xff]
    %v177 = vld [vmem:[#allocation2 + $0x310] sm:$0xff]
    %v178 = vld [vmem:[#allocation2 + $0x318] sm:$0xff]
    %v179 = vld [vmem:[#allocation2 + $0x320] sm:$0xff]
    %v180 = vld [vmem:[#allocation2 + $0x328] sm:$0xff]
    %v181 = vld [vmem:[#allocation2 + $0x330] sm:$0xff]
    %v182 = vld [vmem:[#allocation2 + $0x338] sm:$0xff]
    %v183 = vld [vmem:[#allocation2 + $0x340] sm:$0xff]
    %v184 = vld [vmem:[#allocation2 + $0x348] sm:$0xff]
    %v185 = vld [vmem:[#allocation2 + $0x350] sm:$0xff]
    %v186 = vld [vmem:[#allocation2 + $0x358] sm:$0xff]
    %v187 = vld [vmem:[#allocation2 + $0x360] sm:$0xff]
    %v188 = vld [vmem:[#allocation2 + $0x368] sm:$0xff]
    %v189 = vld [vmem:[#allocation2 + $0x370] sm:$0xff]
    %v190 = vld [vmem:[#allocation2 + $0x378] sm:$0xff]
    %v191 = vld [vmem:[#allocation2 + $0x380] sm:$0xff]
    %v192 = vld [vmem:[#allocation2 + $0x388] sm:$0xff]
    %v193 = vld [vmem:[#allocation2 + $0x390] sm:$0xff]
    %v194 = vld [vmem:[#allocation2 + $0x398] sm:$0xff]
    %v195 = vld [vmem:[#allocation2 + $0x3a0] sm:$0xff]
    %v196 = vld [vmem:[#allocation2 + $0x3a8] sm:$0xff]
    %v197 = vld [vmem:[#allocation2 + $0x3b0] sm:$0xff]
    %v198 = vld [vmem:[#allocation2 + $0x3b8] sm:$0xff]
    %v199 = vld [vmem:[#allocation2 + $0x3c0] sm:$0xff]
    %v200 = vld [vmem:[#allocation2 + $0x3c8] sm:$0xff]
    %v201 = vld [vmem:[#allocation2 + $0x3d0] sm:$0xff]
    %v202 = vld [vmem:[#allocation2 + $0x3d8] sm:$0xff]
    %v203 = vld [vmem:[#allocation2 + $0x3e0] sm:$0xff]
    %v204 = vld [vmem:[#allocation2 + $0x3e8] sm:$0xff]
    %v205 = vld [vmem:[#allocation2 + $0x3f0] sm:$0xff]
    %v206 = vld [vmem:[#allocation2 + $0x3f8] sm:$0xff]
    %v207 = vld [vmem:[#allocation2 + $0x400] sm:$0xff]
    %v208 = vld [vmem:[#allocation2 + $0x408] sm:$0xff]
    %v209 = vld [vmem:[#allocation2 + $0x410] sm:$0xff]
    %v210 = vld [vmem:[#allocation2 + $0x418] sm:$0xff]
    %v211 = vld [vmem:[#allocation2 + $0x420] sm:$0xff]
    %v212 = vld [vmem:[#allocation2 + $0x428] sm:$0xff]
    %v213 = vld [vmem:[#allocation2 + $0x430] sm:$0xff]
    %v214 = vld [vmem:[#allocation2 + $0x438] sm:$0xff]
    %v215 = vld [vmem:[#allocation2 + $0x440] sm:$0xff]
    %v216 = vld [vmem:[#allocation2 + $0x448] sm:$0xff]
    %v217 = vld [vmem:[#allocation2 + $0x450] sm:$0xff]
    %v218 = vld [vmem:[#allocation2 + $0x458] sm:$0xff]
    %v219 = vld [vmem:[#allocation2 + $0x460] sm:$0xff]
    %v220 = vld [vmem:[#allocation2 + $0x468] sm:$0xff]
    %v221 = vld [vmem:[#allocation2 + $0x470] sm:$0xff]
    %v222 = vld [vmem:[#allocation2 + $0x478] sm:$0xff]
    %v223 = vld [vmem:[#allocation2 + $0x480] sm:$0xff]
    %v224 = vld [vmem:[#allocation2 + $0x488] sm:$0xff]
    %v225 = vld [vmem:[#allocation2 + $0x490] sm:$0xff]
    %v226 = vld [vmem:[#allocation2 + $0x498] sm:$0xff]
    %v227 = vld [vmem:[#allocation2 + $0x4a0] sm:$0xff]
    %v228 = vld [vmem:[#allocation2 + $0x4a8] sm:$0xff]
    %v229 = vld [vmem:[#allocation2 + $0x4b0] sm:$0xff]
    %v230 = vld [vmem:[#allocation2 + $0x4b8] sm:$0xff]
    %v231 = vld [vmem:[#allocation2 + $0x4c0] sm:$0xff]
    %v232 = vld [vmem:[#allocation2 + $0x4c8] sm:$0xff]
    %v233 = vld [vmem:[#allocation2 + $0x4d0] sm:$0xff]
    %v234 = vld [vmem:[#allocation2 + $0x4d8] sm:$0xff]
    %v235 = vld [vmem:[#allocation2 + $0x4e0] sm:$0xff]
    %v236 = vld [vmem:[#allocation2 + $0x4e8] sm:$0xff]
    %v237 = vld [vmem:[#allocation2 + $0x4f0] sm:$0xff]
    %v238 = vld [vmem:[#allocation2 + $0x4f8] sm:$0xff]
    %v239 = vld [vmem:[#allocation2 + $0x500] sm:$0xff]
    %v240 = vld [vmem:[#allocation2 + $0x508] sm:$0xff]
    %v241 = vld [vmem:[#allocation2 + $0x510] sm:$0xff]
    %v242 = vld [vmem:[#allocation2 + $0x518] sm:$0xff]
    %v243 = vld [vmem:[#allocation2 + $0x520] sm:$0xff]
    %v244 = vld [vmem:[#allocation2 + $0x528] sm:$0xff]
    %v245 = vld [vmem:[#allocation2 + $0x530] sm:$0xff]
    %v246 = vld [vmem:[#allocation2 + $0x538] sm:$0xff]
    %v247 = vld [vmem:[#allocation2 + $0x540] sm:$0xff]
    %v248 = vld [vmem:[#allocation2 + $0x548] sm:$0xff]
    %v249 = vld [vmem:[#allocation2 + $0x550] sm:$0xff]
    %v250 = vld [vmem:[#allocation2 + $0x558] sm:$0xff]
    %v251 = vld [vmem:[#allocation2 + $0x560] sm:$0xff]
    %v252 = vld [vmem:[#allocation2 + $0x568] sm:$0xff]
    %v253 = vld [vmem:[#allocation2 + $0x570] sm:$0xff]
    %v254 = vld [vmem:[#allocation2 + $0x578] sm:$0xff]
    %v255 = vld [vmem:[#allocation2 + $0x580] sm:$0xff]
    %v256 = vld [vmem:[#allocation2 + $0x588] sm:$0xff]
    %v257 = vld [vmem:[#allocation2 + $0x590] sm:$0xff]
    %v258 = vld [vmem:[#allocation2 + $0x598] sm:$0xff]
    %v259 = vld [vmem:[#allocation2 + $0x5a0] sm:$0xff]
    %v260 = vld [vmem:[#allocation2 + $0x5a8] sm:$0xff]
    %v261 = vld [vmem:[#allocation2 + $0x5b0] sm:$0xff]
    %v262 = vld [vmem:[#allocation2 + $0x5b8] sm:$0xff]
    %v263 = vld [vmem:[#allocation2 + $0x5c0] sm:$0xff]
    %v264 = vld [vmem:[#allocation2 + $0x5c8] sm:$0xff]
    %v265 = vld [vmem:[#allocation2 + $0x5d0] sm:$0xff]
    %v266 = vld [vmem:[#allocation2 + $0x5d8] sm:$0xff]
    %v267 = vld [vmem:[#allocation2 + $0x5e0] sm:$0xff]
    %v268 = vld [vmem:[#allocation2 + $0x5e8] sm:$0xff]
    %v269 = vld [vmem:[#allocation2 + $0x5f0] sm:$0xff]
    %v270 = vld [vmem:[#allocation2 + $0x5f8] sm:$0xff]
    %v271 = vld [vmem:[#allocation2 + $0x600] sm:$0xff]
    %v272 = vld [vmem:[#allocation2 + $0x608] sm:$0xff]
    %v273 = vld [vmem:[#allocation2 + $0x610] sm:$0xff]
    %v274 = vld [vmem:[#allocation2 + $0x618] sm:$0xff]
    %v275 = vld [vmem:[#allocation2 + $0x620] sm:$0xff]
    %v276 = vld [vmem:[#allocation2 + $0x628] sm:$0xff]
    %v277 = vld [vmem:[#allocation2 + $0x630] sm:$0xff]
    %v278 = vld [vmem:[#allocation2 + $0x638] sm:$0xff]
    %v279 = vld [vmem:[#allocation2 + $0x640] sm:$0xff]
    %v280 = vld [vmem:[#allocation2 + $0x648] sm:$0xff]
    %v281 = vld [vmem:[#allocation2 + $0x650] sm:$0xff]
    %v282 = vld [vmem:[#allocation2 + $0x658] sm:$0xff]
    %v283 = vld [vmem:[#allocation2 + $0x660] sm:$0xff]
    %v284 = vld [vmem:[#allocation2 + $0x668] sm:$0xff]
    %v285 = vld [vmem:[#allocation2 + $0x670] sm:$0xff]
    %v286 = vld [vmem:[#allocation2 + $0x678] sm:$0xff]
    %v287 = vld [vmem:[#allocation2 + $0x680] sm:$0xff]
    %v288 = vld [vmem:[#allocation2 + $0x688] sm:$0xff]
    %v289 = vld [vmem:[#allocation2 + $0x690] sm:$0xff]
    %v290 = vld [vmem:[#allocation2 + $0x698] sm:$0xff]
    %v291 = vld [vmem:[#allocation2 + $0x6a0] sm:$0xff]
    %v292 = vld [vmem:[#allocation2 + $0x6a8] sm:$0xff]
    %v293 = vld [vmem:[#allocation2 + $0x6b0] sm:$0xff]
    %v294 = vld [vmem:[#allocation2 + $0x6b8] sm:$0xff]
    %v295 = vld [vmem:[#allocation2 + $0x6c0] sm:$0xff]
    %v296 = vld [vmem:[#allocation2 + $0x6c8] sm:$0xff]
    %v297 = vld [vmem:[#allocation2 + $0x6d0] sm:$0xff]
    %v298 = vld [vmem:[#allocation2 + $0x6d8] sm:$0xff]
    %v299 = vld [vmem:[#allocation2 + $0x6e0] sm:$0xff]
    %v300 = vld [vmem:[#allocation2 + $0x6e8] sm:$0xff]
    %v301 = vld [vmem:[#allocation2 + $0x6f0] sm:$0xff]
    %v302 = vld [vmem:[#allocation2 + $0x6f8] sm:$0xff]
    %v303 = vld [vmem:[#allocation2 + $0x700] sm:$0xff]
    %v304 = vld [vmem:[#allocation2 + $0x708] sm:$0xff]
    %v305 = vld [vmem:[#allocation2 + $0x710] sm:$0xff]
    %v306 = vld [vmem:[#allocation2 + $0x718] sm:$0xff]
    %v307 = vld [vmem:[#allocation2 + $0x720] sm:$0xff]
    %v308 = vld [vmem:[#allocation2 + $0x728] sm:$0xff]
    %v309 = vld [vmem:[#allocation2 + $0x730] sm:$0xff]
    %v310 = vld [vmem:[#allocation2 + $0x738] sm:$0xff]
    %v311 = vld [vmem:[#allocation2 + $0x740] sm:$0xff]
    %v312 = vld [vmem:[#allocation2 + $0x748] sm:$0xff]
    %v313 = vld [vmem:[#allocation2 + $0x750] sm:$0xff]
    %v314 = vld [vmem:[#allocation2 + $0x758] sm:$0xff]
    %v315 = vld [vmem:[#allocation2 + $0x760] sm:$0xff]
    %v316 = vld [vmem:[#allocation2 + $0x768] sm:$0xff]
    %v317 = vld [vmem:[#allocation2 + $0x770] sm:$0xff]
    %v318 = vld [vmem:[#allocation2 + $0x778] sm:$0xff]
    %v319 = vld [vmem:[#allocation2 + $0x780] sm:$0xff]
    %v320 = vld [vmem:[#allocation2 + $0x788] sm:$0xff]
    %v321 = vld [vmem:[#allocation2 + $0x790] sm:$0xff]
    %v322 = vld [vmem:[#allocation2 + $0x798] sm:$0xff]
    %v323 = vld [vmem:[#allocation2 + $0x7a0] sm:$0xff]
    %v324 = vld [vmem:[#allocation2 + $0x7a8] sm:$0xff]
    %v325 = vld [vmem:[#allocation2 + $0x7b0] sm:$0xff]
    %v326 = vld [vmem:[#allocation2 + $0x7b8] sm:$0xff]
    %v327 = vld [vmem:[#allocation2 + $0x7c0] sm:$0xff]
    %v328 = vld [vmem:[#allocation2 + $0x7c8] sm:$0xff]
    %v329 = vld [vmem:[#allocation2 + $0x7d0] sm:$0xff]
    %v330 = vld [vmem:[#allocation2 + $0x7d8] sm:$0xff]
    %v331 = vld [vmem:[#allocation2 + $0x7e0] sm:$0xff]
    %v332 = vld [vmem:[#allocation2 + $0x7e8] sm:$0xff]
    %v333 = vld [vmem:[#allocation2 + $0x7f0] sm:$0xff]
    %v334 = vld [vmem:[#allocation2 + $0x7f8] sm:$0xff]
    %v335 = vld [vmem:[%s2] sm:$0xf]
    %v337 = vperm.slane %v335, 0
    %v338 = vperm.slane %v335, 1
    %v339 = vperm.slane %v335, 2
    %v340 = vperm.slane %v335, 3
    %v601 = vunpack.c.l.b16 %v79
    %v602 = vunpack.c.h.b16 %v79
    %v603 = vunpack.c.l.b16 %v80
    %v604 = vunpack.c.h.b16 %v80
    %v605 = vunpack.c.l.b16 %v81
    %v606 = vunpack.c.h.b16 %v81
    %v607 = vunpack.c.l.b16 %v82
    %v608 = vunpack.c.h.b16 %v82
    %v609 = vunpack.c.l.b16 %v83
    %v610 = vunpack.c.h.b16 %v83
    %v611 = vunpack.c.l.b16 %v84
    %v612 = vunpack.c.h.b16 %v84
    %v613 = vunpack.c.l.b16 %v85
    %v614 = vunpack.c.h.b16 %v85
    %v615 = vunpack.c.l.b16 %v86
    %v616 = vunpack.c.h.b16 %v86
    %v617 = vunpack.c.l.b16 %v87
    %v618 = vunpack.c.h.b16 %v87
    %v619 = vunpack.c.l.b16 %v88
    %v620 = vunpack.c.h.b16 %v88
    %v621 = vunpack.c.l.b16 %v89
    %v622 = vunpack.c.h.b16 %v89
    %v623 = vunpack.c.l.b16 %v90
    %v624 = vunpack.c.h.b16 %v90
    %v625 = vunpack.c.l.b16 %v91
    %v626 = vunpack.c.h.b16 %v91
    %v627 = vunpack.c.l.b16 %v92
    %v628 = vunpack.c.h.b16 %v92
    %v629 = vunpack.c.l.b16 %v93
    %v630 = vunpack.c.h.b16 %v93
    %v631 = vunpack.c.l.b16 %v94
    %v632 = vunpack.c.h.b16 %v94
    %v633 = vunpack.c.l.b16 %v95
    %v634 = vunpack.c.h.b16 %v95
    %v635 = vunpack.c.l.b16 %v96
    %v636 = vunpack.c.h.b16 %v96
    %v637 = vunpack.c.l.b16 %v97
    %v638 = vunpack.c.h.b16 %v97
    %v639 = vunpack.c.l.b16 %v98
    %v640 = vunpack.c.h.b16 %v98
    %v641 = vunpack.c.l.b16 %v99
    %v642 = vunpack.c.h.b16 %v99
    %v643 = vunpack.c.l.b16 %v100
    %v644 = vunpack.c.h.b16 %v100
    %v645 = vunpack.c.l.b16 %v101
    %v646 = vunpack.c.h.b16 %v101
    %v647 = vunpack.c.l.b16 %v102
    %v648 = vunpack.c.h.b16 %v102
    %v649 = vunpack.c.l.b16 %v103
    %v650 = vunpack.c.h.b16 %v103
    %v651 = vunpack.c.l.b16 %v104
    %v652 = vunpack.c.h.b16 %v104
    %v653 = vunpack.c.l.b16 %v105
    %v654 = vunpack.c.h.b16 %v105
    %v655 = vunpack.c.l.b16 %v106
    %v656 = vunpack.c.h.b16 %v106
    %v657 = vunpack.c.l.b16 %v107
    %v658 = vunpack.c.h.b16 %v107
    %v659 = vunpack.c.l.b16 %v108
    %v660 = vunpack.c.h.b16 %v108
    %v661 = vunpack.c.l.b16 %v109
    %v662 = vunpack.c.h.b16 %v109
    %v663 = vunpack.c.l.b16 %v110
    %v664 = vunpack.c.h.b16 %v110
    %v665 = vunpack.c.l.b16 %v111
    %v666 = vunpack.c.h.b16 %v111
    %v667 = vunpack.c.l.b16 %v112
    %v668 = vunpack.c.h.b16 %v112
    %v669 = vunpack.c.l.b16 %v113
    %v670 = vunpack.c.h.b16 %v113
    %v671 = vunpack.c.l.b16 %v114
    %v672 = vunpack.c.h.b16 %v114
    %v673 = vunpack.c.l.b16 %v115
    %v674 = vunpack.c.h.b16 %v115
    %v675 = vunpack.c.l.b16 %v116
    %v676 = vunpack.c.h.b16 %v116
    %v677 = vunpack.c.l.b16 %v117
    %v678 = vunpack.c.h.b16 %v117
    %v679 = vunpack.c.l.b16 %v118
    %v680 = vunpack.c.h.b16 %v118
    %v681 = vunpack.c.l.b16 %v119
    %v682 = vunpack.c.h.b16 %v119
    %v683 = vunpack.c.l.b16 %v120
    %v684 = vunpack.c.h.b16 %v120
    %v685 = vunpack.c.l.b16 %v121
    %v686 = vunpack.c.h.b16 %v121
    %v687 = vunpack.c.l.b16 %v122
    %v688 = vunpack.c.h.b16 %v122
    %v689 = vunpack.c.l.b16 %v123
    %v690 = vunpack.c.h.b16 %v123
    %v691 = vunpack.c.l.b16 %v124
    %v692 = vunpack.c.h.b16 %v124
    %v693 = vunpack.c.l.b16 %v125
    %v694 = vunpack.c.h.b16 %v125
    %v695 = vunpack.c.l.b16 %v126
    %v696 = vunpack.c.h.b16 %v126
    %v697 = vunpack.c.l.b16 %v127
    %v698 = vunpack.c.h.b16 %v127
    %v699 = vunpack.c.l.b16 %v128
    %v700 = vunpack.c.h.b16 %v128
    %v701 = vunpack.c.l.b16 %v129
    %v702 = vunpack.c.h.b16 %v129
    %v703 = vunpack.c.l.b16 %v130
    %v704 = vunpack.c.h.b16 %v130
    %v705 = vunpack.c.l.b16 %v131
    %v706 = vunpack.c.h.b16 %v131
    %v707 = vunpack.c.l.b16 %v132
    %v708 = vunpack.c.h.b16 %v132
    %v709 = vunpack.c.l.b16 %v133
    %v710 = vunpack.c.h.b16 %v133
    %v711 = vunpack.c.l.b16 %v134
    %v712 = vunpack.c.h.b16 %v134
    %v713 = vunpack.c.l.b16 %v135
    %v714 = vunpack.c.h.b16 %v135
    %v715 = vunpack.c.l.b16 %v136
    %v716 = vunpack.c.h.b16 %v136
    %v717 = vunpack.c.l.b16 %v137
    %v718 = vunpack.c.h.b16 %v137
    %v719 = vunpack.c.l.b16 %v138
    %v720 = vunpack.c.h.b16 %v138
    %v721 = vunpack.c.l.b16 %v139
    %v722 = vunpack.c.h.b16 %v139
    %v723 = vunpack.c.l.b16 %v140
    %v724 = vunpack.c.h.b16 %v140
    %v725 = vunpack.c.l.b16 %v141
    %v726 = vunpack.c.h.b16 %v141
    %v727 = vunpack.c.l.b16 %v142
    %v728 = vunpack.c.h.b16 %v142
    %v729 = vunpack.c.l.b16 %v143
    %v730 = vunpack.c.h.b16 %v143
    %v731 = vunpack.c.l.b16 %v144
    %v732 = vunpack.c.h.b16 %v144
    %v733 = vunpack.c.l.b16 %v145
    %v734 = vunpack.c.h.b16 %v145
    %v735 = vunpack.c.l.b16 %v146
    %v736 = vunpack.c.h.b16 %v146
    %v737 = vunpack.c.l.b16 %v147
    %v738 = vunpack.c.h.b16 %v147
    %v739 = vunpack.c.l.b16 %v148
    %v740 = vunpack.c.h.b16 %v148
    %v741 = vunpack.c.l.b16 %v149
    %v742 = vunpack.c.h.b16 %v149
    %v743 = vunpack.c.l.b16 %v150
    %v744 = vunpack.c.h.b16 %v150
    %v745 = vunpack.c.l.b16 %v151
    %v746 = vunpack.c.h.b16 %v151
    %v747 = vunpack.c.l.b16 %v152
    %v748 = vunpack.c.h.b16 %v152
    %v749 = vunpack.c.l.b16 %v153
    %v750 = vunpack.c.h.b16 %v153
    %v751 = vunpack.c.l.b16 %v154
    %v752 = vunpack.c.h.b16 %v154
    %v753 = vunpack.c.l.b16 %v155
    %v754 = vunpack.c.h.b16 %v155
    %v755 = vunpack.c.l.b16 %v156
    %v756 = vunpack.c.h.b16 %v156
    %v757 = vunpack.c.l.b16 %v157
    %v758 = vunpack.c.h.b16 %v157
    %v759 = vunpack.c.l.b16 %v158
    %v760 = vunpack.c.h.b16 %v158
    %v761 = vunpack.c.l.b16 %v159
    %v762 = vunpack.c.h.b16 %v159
    %v763 = vunpack.c.l.b16 %v160
    %v764 = vunpack.c.h.b16 %v160
    %v765 = vunpack.c.l.b16 %v161
    %v766 = vunpack.c.h.b16 %v161
    %v767 = vunpack.c.l.b16 %v162
    %v768 = vunpack.c.h.b16 %v162
    %v769 = vunpack.c.l.b16 %v163
    %v770 = vunpack.c.h.b16 %v163
    %v771 = vunpack.c.l.b16 %v164
    %v772 = vunpack.c.h.b16 %v164
    %v773 = vunpack.c.l.b16 %v165
    %v774 = vunpack.c.h.b16 %v165
    %v775 = vunpack.c.l.b16 %v166
    %v776 = vunpack.c.h.b16 %v166
    %v777 = vunpack.c.l.b16 %v167
    %v778 = vunpack.c.h.b16 %v167
    %v779 = vunpack.c.l.b16 %v168
    %v780 = vunpack.c.h.b16 %v168
    %v781 = vunpack.c.l.b16 %v169
    %v782 = vunpack.c.h.b16 %v169
    %v783 = vunpack.c.l.b16 %v170
    %v784 = vunpack.c.h.b16 %v170
    %v785 = vunpack.c.l.b16 %v171
    %v786 = vunpack.c.h.b16 %v171
    %v787 = vunpack.c.l.b16 %v172
    %v788 = vunpack.c.h.b16 %v172
    %v789 = vunpack.c.l.b16 %v173
    %v790 = vunpack.c.h.b16 %v173
    %v791 = vunpack.c.l.b16 %v174
    %v792 = vunpack.c.h.b16 %v174
    %v793 = vunpack.c.l.b16 %v175
    %v794 = vunpack.c.h.b16 %v175
    %v795 = vunpack.c.l.b16 %v176
    %v796 = vunpack.c.h.b16 %v176
    %v797 = vunpack.c.l.b16 %v177
    %v798 = vunpack.c.h.b16 %v177
    %v799 = vunpack.c.l.b16 %v178
    %v800 = vunpack.c.h.b16 %v178
    %v801 = vunpack.c.l.b16 %v179
    %v802 = vunpack.c.h.b16 %v179
    %v803 = vunpack.c.l.b16 %v180
    %v804 = vunpack.c.h.b16 %v180
    %v805 = vunpack.c.l.b16 %v181
    %v806 = vunpack.c.h.b16 %v181
    %v807 = vunpack.c.l.b16 %v182
    %v808 = vunpack.c.h.b16 %v182
    %v809 = vunpack.c.l.b16 %v183
    %v810 = vunpack.c.h.b16 %v183
    %v811 = vunpack.c.l.b16 %v184
    %v812 = vunpack.c.h.b16 %v184
    %v813 = vunpack.c.l.b16 %v185
    %v814 = vunpack.c.h.b16 %v185
    %v815 = vunpack.c.l.b16 %v186
    %v816 = vunpack.c.h.b16 %v186
    %v817 = vunpack.c.l.b16 %v187
    %v818 = vunpack.c.h.b16 %v187
    %v819 = vunpack.c.l.b16 %v188
    %v820 = vunpack.c.h.b16 %v188
    %v821 = vunpack.c.l.b16 %v189
    %v822 = vunpack.c.h.b16 %v189
    %v823 = vunpack.c.l.b16 %v190
    %v824 = vunpack.c.h.b16 %v190
    %v825 = vunpack.c.l.b16 %v191
    %v826 = vunpack.c.h.b16 %v191
    %v827 = vunpack.c.l.b16 %v192
    %v828 = vunpack.c.h.b16 %v192
    %v829 = vunpack.c.l.b16 %v193
    %v830 = vunpack.c.h.b16 %v193
    %v831 = vunpack.c.l.b16 %v194
    %v832 = vunpack.c.h.b16 %v194
    %v833 = vunpack.c.l.b16 %v195
    %v834 = vunpack.c.h.b16 %v195
    %v835 = vunpack.c.l.b16 %v196
    %v836 = vunpack.c.h.b16 %v196
    %v837 = vunpack.c.l.b16 %v197
    %v838 = vunpack.c.h.b16 %v197
    %v839 = vunpack.c.l.b16 %v198
    %v840 = vunpack.c.h.b16 %v198
    %v841 = vunpack.c.l.b16 %v199
    %v842 = vunpack.c.h.b16 %v199
    %v843 = vunpack.c.l.b16 %v200
    %v844 = vunpack.c.h.b16 %v200
    %v845 = vunpack.c.l.b16 %v201
    %v846 = vunpack.c.h.b16 %v201
    %v847 = vunpack.c.l.b16 %v202
    %v848 = vunpack.c.h.b16 %v202
    %v849 = vunpack.c.l.b16 %v203
    %v850 = vunpack.c.h.b16 %v203
    %v851 = vunpack.c.l.b16 %v204
    %v852 = vunpack.c.h.b16 %v204
    %v853 = vunpack.c.l.b16 %v205
    %v854 = vunpack.c.h.b16 %v205
    %v855 = vunpack.c.l.b16 %v206
    %v856 = vunpack.c.h.b16 %v206
    %v857 = vunpack.c.l.b16 %v207
    %v858 = vunpack.c.h.b16 %v207
    %v859 = vunpack.c.l.b16 %v208
    %v860 = vunpack.c.h.b16 %v208
    %v861 = vunpack.c.l.b16 %v209
    %v862 = vunpack.c.h.b16 %v209
    %v863 = vunpack.c.l.b16 %v210
    %v864 = vunpack.c.h.b16 %v210
    %v865 = vunpack.c.l.b16 %v211
    %v866 = vunpack.c.h.b16 %v211
    %v867 = vunpack.c.l.b16 %v212
    %v868 = vunpack.c.h.b16 %v212
    %v869 = vunpack.c.l.b16 %v213
    %v870 = vunpack.c.h.b16 %v213
    %v871 = vunpack.c.l.b16 %v214
    %v872 = vunpack.c.h.b16 %v214
    %v873 = vunpack.c.l.b16 %v215
    %v874 = vunpack.c.h.b16 %v215
    %v875 = vunpack.c.l.b16 %v216
    %v876 = vunpack.c.h.b16 %v216
    %v877 = vunpack.c.l.b16 %v217
    %v878 = vunpack.c.h.b16 %v217
    %v879 = vunpack.c.l.b16 %v218
    %v880 = vunpack.c.h.b16 %v218
    %v881 = vunpack.c.l.b16 %v219
    %v882 = vunpack.c.h.b16 %v219
    %v883 = vunpack.c.l.b16 %v220
    %v884 = vunpack.c.h.b16 %v220
    %v885 = vunpack.c.l.b16 %v221
    %v886 = vunpack.c.h.b16 %v221
    %v887 = vunpack.c.l.b16 %v222
    %v888 = vunpack.c.h.b16 %v222
    %v889 = vunpack.c.l.b16 %v223
    %v890 = vunpack.c.h.b16 %v223
    %v891 = vunpack.c.l.b16 %v224
    %v892 = vunpack.c.h.b16 %v224
    %v893 = vunpack.c.l.b16 %v225
    %v894 = vunpack.c.h.b16 %v225
    %v895 = vunpack.c.l.b16 %v226
    %v896 = vunpack.c.h.b16 %v226
    %v897 = vunpack.c.l.b16 %v227
    %v898 = vunpack.c.h.b16 %v227
    %v899 = vunpack.c.l.b16 %v228
    %v900 = vunpack.c.h.b16 %v228
    %v901 = vunpack.c.l.b16 %v229
    %v902 = vunpack.c.h.b16 %v229
    %v903 = vunpack.c.l.b16 %v230
    %v904 = vunpack.c.h.b16 %v230
    %v905 = vunpack.c.l.b16 %v231
    %v906 = vunpack.c.h.b16 %v231
    %v907 = vunpack.c.l.b16 %v232
    %v908 = vunpack.c.h.b16 %v232
    %v909 = vunpack.c.l.b16 %v233
    %v910 = vunpack.c.h.b16 %v233
    %v911 = vunpack.c.l.b16 %v234
    %v912 = vunpack.c.h.b16 %v234
    %v913 = vunpack.c.l.b16 %v235
    %v914 = vunpack.c.h.b16 %v235
    %v915 = vunpack.c.l.b16 %v236
    %v916 = vunpack.c.h.b16 %v236
    %v917 = vunpack.c.l.b16 %v237
    %v918 = vunpack.c.h.b16 %v237
    %v919 = vunpack.c.l.b16 %v238
    %v920 = vunpack.c.h.b16 %v238
    %v921 = vunpack.c.l.b16 %v239
    %v922 = vunpack.c.h.b16 %v239
    %v923 = vunpack.c.l.b16 %v240
    %v924 = vunpack.c.h.b16 %v240
    %v925 = vunpack.c.l.b16 %v241
    %v926 = vunpack.c.h.b16 %v241
    %v927 = vunpack.c.l.b16 %v242
    %v928 = vunpack.c.h.b16 %v242
    %v929 = vunpack.c.l.b16 %v243
    %v930 = vunpack.c.h.b16 %v243
    %v931 = vunpack.c.l.b16 %v244
    %v932 = vunpack.c.h.b16 %v244
    %v933 = vunpack.c.l.b16 %v245
    %v934 = vunpack.c.h.b16 %v245
    %v935 = vunpack.c.l.b16 %v246
    %v936 = vunpack.c.h.b16 %v246
    %v937 = vunpack.c.l.b16 %v247
    %v938 = vunpack.c.h.b16 %v247
    %v939 = vunpack.c.l.b16 %v248
    %v940 = vunpack.c.h.b16 %v248
    %v941 = vunpack.c.l.b16 %v249
    %v942 = vunpack.c.h.b16 %v249
    %v943 = vunpack.c.l.b16 %v250
    %v944 = vunpack.c.h.b16 %v250
    %v945 = vunpack.c.l.b16 %v251
    %v946 = vunpack.c.h.b16 %v251
    %v947 = vunpack.c.l.b16 %v252
    %v948 = vunpack.c.h.b16 %v252
    %v949 = vunpack.c.l.b16 %v253
    %v950 = vunpack.c.h.b16 %v253
    %v951 = vunpack.c.l.b16 %v254
    %v952 = vunpack.c.h.b16 %v254
    %v953 = vunpack.c.l.b16 %v255
    %v954 = vunpack.c.h.b16 %v255
    %v955 = vunpack.c.l.b16 %v256
    %v956 = vunpack.c.h.b16 %v256
    %v957 = vunpack.c.l.b16 %v257
    %v958 = vunpack.c.h.b16 %v257
    %v959 = vunpack.c.l.b16 %v258
    %v960 = vunpack.c.h.b16 %v258
    %v961 = vunpack.c.l.b16 %v259
    %v962 = vunpack.c.h.b16 %v259
    %v963 = vunpack.c.l.b16 %v260
    %v964 = vunpack.c.h.b16 %v260
    %v965 = vunpack.c.l.b16 %v261
    %v966 = vunpack.c.h.b16 %v261
    %v967 = vunpack.c.l.b16 %v262
    %v968 = vunpack.c.h.b16 %v262
    %v969 = vunpack.c.l.b16 %v263
    %v970 = vunpack.c.h.b16 %v263
    %v971 = vunpack.c.l.b16 %v264
    %v972 = vunpack.c.h.b16 %v264
    %v973 = vunpack.c.l.b16 %v265
    %v974 = vunpack.c.h.b16 %v265
    %v975 = vunpack.c.l.b16 %v266
    %v976 = vunpack.c.h.b16 %v266
    %v977 = vunpack.c.l.b16 %v267
    %v978 = vunpack.c.h.b16 %v267
    %v979 = vunpack.c.l.b16 %v268
    %v980 = vunpack.c.h.b16 %v268
    %v981 = vunpack.c.l.b16 %v269
    %v982 = vunpack.c.h.b16 %v269
    %v983 = vunpack.c.l.b16 %v270
    %v984 = vunpack.c.h.b16 %v270
    %v985 = vunpack.c.l.b16 %v271
    %v986 = vunpack.c.h.b16 %v271
    %v987 = vunpack.c.l.b16 %v272
    %v988 = vunpack.c.h.b16 %v272
    %v989 = vunpack.c.l.b16 %v273
    %v990 = vunpack.c.h.b16 %v273
    %v991 = vunpack.c.l.b16 %v274
    %v992 = vunpack.c.h.b16 %v274
    %v993 = vunpack.c.l.b16 %v275
    %v994 = vunpack.c.h.b16 %v275
    %v995 = vunpack.c.l.b16 %v276
    %v996 = vunpack.c.h.b16 %v276
    %v997 = vunpack.c.l.b16 %v277
    %v998 = vunpack.c.h.b16 %v277
    %v999 = vunpack.c.l.b16 %v278
    %v1000 = vunpack.c.h.b16 %v278
    %v1001 = vunpack.c.l.b16 %v279
    %v1002 = vunpack.c.h.b16 %v279
    %v1003 = vunpack.c.l.b16 %v280
    %v1004 = vunpack.c.h.b16 %v280
    %v1005 = vunpack.c.l.b16 %v281
    %v1006 = vunpack.c.h.b16 %v281
    %v1007 = vunpack.c.l.b16 %v282
    %v1008 = vunpack.c.h.b16 %v282
    %v1009 = vunpack.c.l.b16 %v283
    %v1010 = vunpack.c.h.b16 %v283
    %v1011 = vunpack.c.l.b16 %v284
    %v1012 = vunpack.c.h.b16 %v284
    %v1013 = vunpack.c.l.b16 %v285
    %v1014 = vunpack.c.h.b16 %v285
    %v1015 = vunpack.c.l.b16 %v286
    %v1016 = vunpack.c.h.b16 %v286
    %v1017 = vunpack.c.l.b16 %v287
    %v1018 = vunpack.c.h.b16 %v287
    %v1019 = vunpack.c.l.b16 %v288
    %v1020 = vunpack.c.h.b16 %v288
    %v1021 = vunpack.c.l.b16 %v289
    %v1022 = vunpack.c.h.b16 %v289
    %v1023 = vunpack.c.l.b16 %v290
    %v1024 = vunpack.c.h.b16 %v290
    %v1025 = vunpack.c.l.b16 %v291
    %v1026 = vunpack.c.h.b16 %v291
    %v1027 = vunpack.c.l.b16 %v292
    %v1028 = vunpack.c.h.b16 %v292
    %v1029 = vunpack.c.l.b16 %v293
    %v1030 = vunpack.c.h.b16 %v293
    %v1031 = vunpack.c.l.b16 %v294
    %v1032 = vunpack.c.h.b16 %v294
    %v1033 = vunpack.c.l.b16 %v295
    %v1034 = vunpack.c.h.b16 %v295
    %v1035 = vunpack.c.l.b16 %v296
    %v1036 = vunpack.c.h.b16 %v296
    %v1037 = vunpack.c.l.b16 %v297
    %v1038 = vunpack.c.h.b16 %v297
    %v1039 = vunpack.c.l.b16 %v298
    %v1040 = vunpack.c.h.b16 %v298
    %v1041 = vunpack.c.l.b16 %v299
    %v1042 = vunpack.c.h.b16 %v299
    %v1043 = vunpack.c.l.b16 %v300
    %v1044 = vunpack.c.h.b16 %v300
    %v1045 = vunpack.c.l.b16 %v301
    %v1046 = vunpack.c.h.b16 %v301
    %v1047 = vunpack.c.l.b16 %v302
    %v1048 = vunpack.c.h.b16 %v302
    %v1049 = vunpack.c.l.b16 %v303
    %v1050 = vunpack.c.h.b16 %v303
    %v1051 = vunpack.c.l.b16 %v304
    %v1052 = vunpack.c.h.b16 %v304
    %v1053 = vunpack.c.l.b16 %v305
    %v1054 = vunpack.c.h.b16 %v305
    %v1055 = vunpack.c.l.b16 %v306
    %v1056 = vunpack.c.h.b16 %v306
    %v1057 = vunpack.c.l.b16 %v307
    %v1058 = vunpack.c.h.b16 %v307
    %v1059 = vunpack.c.l.b16 %v308
    %v1060 = vunpack.c.h.b16 %v308
    %v1061 = vunpack.c.l.b16 %v309
    %v1062 = vunpack.c.h.b16 %v309
    %v1063 = vunpack.c.l.b16 %v310
    %v1064 = vunpack.c.h.b16 %v310
    %v1065 = vunpack.c.l.b16 %v311
    %v1066 = vunpack.c.h.b16 %v311
    %v1067 = vunpack.c.l.b16 %v312
    %v1068 = vunpack.c.h.b16 %v312
    %v1069 = vunpack.c.l.b16 %v313
    %v1070 = vunpack.c.h.b16 %v313
    %v1071 = vunpack.c.l.b16 %v314
    %v1072 = vunpack.c.h.b16 %v314
    %v1073 = vunpack.c.l.b16 %v315
    %v1074 = vunpack.c.h.b16 %v315
    %v1075 = vunpack.c.l.b16 %v316
    %v1076 = vunpack.c.h.b16 %v316
    %v1077 = vunpack.c.l.b16 %v317
    %v1078 = vunpack.c.h.b16 %v317
    %v1079 = vunpack.c.l.b16 %v318
    %v1080 = vunpack.c.h.b16 %v318
    %v1081 = vunpack.c.l.b16 %v319
    %v1082 = vunpack.c.h.b16 %v319
    %v1083 = vunpack.c.l.b16 %v320
    %v1084 = vunpack.c.h.b16 %v320
    %v1085 = vunpack.c.l.b16 %v321
    %v1086 = vunpack.c.h.b16 %v321
    %v1087 = vunpack.c.l.b16 %v322
    %v1088 = vunpack.c.h.b16 %v322
    %v1089 = vunpack.c.l.b16 %v323
    %v1090 = vunpack.c.h.b16 %v323
    %v1091 = vunpack.c.l.b16 %v324
    %v1092 = vunpack.c.h.b16 %v324
    %v1093 = vunpack.c.l.b16 %v325
    %v1094 = vunpack.c.h.b16 %v325
    %v1095 = vunpack.c.l.b16 %v326
    %v1096 = vunpack.c.h.b16 %v326
    %v1097 = vunpack.c.l.b16 %v327
    %v1098 = vunpack.c.h.b16 %v327
    %v1099 = vunpack.c.l.b16 %v328
    %v1100 = vunpack.c.h.b16 %v328
    %v1101 = vunpack.c.l.b16 %v329
    %v1102 = vunpack.c.h.b16 %v329
    %v1103 = vunpack.c.l.b16 %v330
    %v1104 = vunpack.c.h.b16 %v330
    %v1105 = vunpack.c.l.b16 %v331
    %v1106 = vunpack.c.h.b16 %v331
    %v1107 = vunpack.c.l.b16 %v332
    %v1108 = vunpack.c.h.b16 %v332
    %v1109 = vunpack.c.l.b16 %v333
    %v1110 = vunpack.c.h.b16 %v333
    %v1111 = vunpack.c.l.b16 %v334
    %v1112 = vunpack.c.h.b16 %v334
    %v1113 = vpack.c.b16 %v605, %v601
    %v1114 = vpack.c.b16 %v606, %v602
    %v1115 = vpack.c.b16 %v607, %v603
    %v1116 = vpack.c.b16 %v608, %v604
    %v1117 = vpack.c.b16 %v613, %v609
    %v1118 = vpack.c.b16 %v614, %v610
    %v1119 = vpack.c.b16 %v615, %v611
    %v1120 = vpack.c.b16 %v616, %v612
    %v1121 = vpack.c.b16 %v621, %v617
    %v1122 = vpack.c.b16 %v622, %v618
    %v1123 = vpack.c.b16 %v623, %v619
    %v1124 = vpack.c.b16 %v624, %v620
    %v1125 = vpack.c.b16 %v629, %v625
    %v1126 = vpack.c.b16 %v630, %v626
    %v1127 = vpack.c.b16 %v631, %v627
    %v1128 = vpack.c.b16 %v632, %v628
    %v1129 = vpack.c.b16 %v637, %v633
    %v1130 = vpack.c.b16 %v638, %v634
    %v1131 = vpack.c.b16 %v639, %v635
    %v1132 = vpack.c.b16 %v640, %v636
    %v1133 = vpack.c.b16 %v645, %v641
    %v1134 = vpack.c.b16 %v646, %v642
    %v1135 = vpack.c.b16 %v647, %v643
    %v1136 = vpack.c.b16 %v648, %v644
    %v1137 = vpack.c.b16 %v653, %v649
    %v1138 = vpack.c.b16 %v654, %v650
    %v1139 = vpack.c.b16 %v655, %v651
    %v1140 = vpack.c.b16 %v656, %v652
    %v1141 = vpack.c.b16 %v661, %v657
    %v1142 = vpack.c.b16 %v662, %v658
    %v1143 = vpack.c.b16 %v663, %v659
    %v1144 = vpack.c.b16 %v664, %v660
    %v1145 = vpack.c.b16 %v669, %v665
    %v1146 = vpack.c.b16 %v670, %v666
    %v1147 = vpack.c.b16 %v671, %v667
    %v1148 = vpack.c.b16 %v672, %v668
    %v1149 = vpack.c.b16 %v677, %v673
    %v1150 = vpack.c.b16 %v678, %v674
    %v1151 = vpack.c.b16 %v679, %v675
    %v1152 = vpack.c.b16 %v680, %v676
    %v1153 = vpack.c.b16 %v685, %v681
    %v1154 = vpack.c.b16 %v686, %v682
    %v1155 = vpack.c.b16 %v687, %v683
    %v1156 = vpack.c.b16 %v688, %v684
    %v1157 = vpack.c.b16 %v693, %v689
    %v1158 = vpack.c.b16 %v694, %v690
    %v1159 = vpack.c.b16 %v695, %v691
    %v1160 = vpack.c.b16 %v696, %v692
    %v1161 = vpack.c.b16 %v701, %v697
    %v1162 = vpack.c.b16 %v702, %v698
    %v1163 = vpack.c.b16 %v703, %v699
    %v1164 = vpack.c.b16 %v704, %v700
    %v1165 = vpack.c.b16 %v709, %v705
    %v1166 = vpack.c.b16 %v710, %v706
    %v1167 = vpack.c.b16 %v711, %v707
    %v1168 = vpack.c.b16 %v712, %v708
    %v1169 = vpack.c.b16 %v717, %v713
    %v1170 = vpack.c.b16 %v718, %v714
    %v1171 = vpack.c.b16 %v719, %v715
    %v1172 = vpack.c.b16 %v720, %v716
    %v1173 = vpack.c.b16 %v725, %v721
    %v1174 = vpack.c.b16 %v726, %v722
    %v1175 = vpack.c.b16 %v727, %v723
    %v1176 = vpack.c.b16 %v728, %v724
    %v1177 = vpack.c.b16 %v733, %v729
    %v1178 = vpack.c.b16 %v734, %v730
    %v1179 = vpack.c.b16 %v735, %v731
    %v1180 = vpack.c.b16 %v736, %v732
    %v1181 = vpack.c.b16 %v741, %v737
    %v1182 = vpack.c.b16 %v742, %v738
    %v1183 = vpack.c.b16 %v743, %v739
    %v1184 = vpack.c.b16 %v744, %v740
    %v1185 = vpack.c.b16 %v749, %v745
    %v1186 = vpack.c.b16 %v750, %v746
    %v1187 = vpack.c.b16 %v751, %v747
    %v1188 = vpack.c.b16 %v752, %v748
    %v1189 = vpack.c.b16 %v757, %v753
    %v1190 = vpack.c.b16 %v758, %v754
    %v1191 = vpack.c.b16 %v759, %v755
    %v1192 = vpack.c.b16 %v760, %v756
    %v1193 = vpack.c.b16 %v765, %v761
    %v1194 = vpack.c.b16 %v766, %v762
    %v1195 = vpack.c.b16 %v767, %v763
    %v1196 = vpack.c.b16 %v768, %v764
    %v1197 = vpack.c.b16 %v773, %v769
    %v1198 = vpack.c.b16 %v774, %v770
    %v1199 = vpack.c.b16 %v775, %v771
    %v1200 = vpack.c.b16 %v776, %v772
    %v1201 = vpack.c.b16 %v781, %v777
    %v1202 = vpack.c.b16 %v782, %v778
    %v1203 = vpack.c.b16 %v783, %v779
    %v1204 = vpack.c.b16 %v784, %v780
    %v1205 = vpack.c.b16 %v789, %v785
    %v1206 = vpack.c.b16 %v790, %v786
    %v1207 = vpack.c.b16 %v791, %v787
    %v1208 = vpack.c.b16 %v792, %v788
    %v1209 = vpack.c.b16 %v797, %v793
    %v1210 = vpack.c.b16 %v798, %v794
    %v1211 = vpack.c.b16 %v799, %v795
    %v1212 = vpack.c.b16 %v800, %v796
    %v1213 = vpack.c.b16 %v805, %v801
    %v1214 = vpack.c.b16 %v806, %v802
    %v1215 = vpack.c.b16 %v807, %v803
    %v1216 = vpack.c.b16 %v808, %v804
    %v1217 = vpack.c.b16 %v813, %v809
    %v1218 = vpack.c.b16 %v814, %v810
    %v1219 = vpack.c.b16 %v815, %v811
    %v1220 = vpack.c.b16 %v816, %v812
    %v1221 = vpack.c.b16 %v821, %v817
    %v1222 = vpack.c.b16 %v822, %v818
    %v1223 = vpack.c.b16 %v823, %v819
    %v1224 = vpack.c.b16 %v824, %v820
    %v1225 = vpack.c.b16 %v829, %v825
    %v1226 = vpack.c.b16 %v830, %v826
    %v1227 = vpack.c.b16 %v831, %v827
    %v1228 = vpack.c.b16 %v832, %v828
    %v1229 = vpack.c.b16 %v837, %v833
    %v1230 = vpack.c.b16 %v838, %v834
    %v1231 = vpack.c.b16 %v839, %v835
    %v1232 = vpack.c.b16 %v840, %v836
    %v1233 = vpack.c.b16 %v845, %v841
    %v1234 = vpack.c.b16 %v846, %v842
    %v1235 = vpack.c.b16 %v847, %v843
    %v1236 = vpack.c.b16 %v848, %v844
    %v1237 = vpack.c.b16 %v853, %v849
    %v1238 = vpack.c.b16 %v854, %v850
    %v1239 = vpack.c.b16 %v855, %v851
    %v1240 = vpack.c.b16 %v856, %v852
    %v1241 = vpack.c.b16 %v861, %v857
    %v1242 = vpack.c.b16 %v862, %v858
    %v1243 = vpack.c.b16 %v863, %v859
    %v1244 = vpack.c.b16 %v864, %v860
    %v1245 = vpack.c.b16 %v869, %v865
    %v1246 = vpack.c.b16 %v870, %v866
    %v1247 = vpack.c.b16 %v871, %v867
    %v1248 = vpack.c.b16 %v872, %v868
    %v1249 = vpack.c.b16 %v877, %v873
    %v1250 = vpack.c.b16 %v878, %v874
    %v1251 = vpack.c.b16 %v879, %v875
    %v1252 = vpack.c.b16 %v880, %v876
    %v1253 = vpack.c.b16 %v885, %v881
    %v1254 = vpack.c.b16 %v886, %v882
    %v1255 = vpack.c.b16 %v887, %v883
    %v1256 = vpack.c.b16 %v888, %v884
    %v1257 = vpack.c.b16 %v893, %v889
    %v1258 = vpack.c.b16 %v894, %v890
    %v1259 = vpack.c.b16 %v895, %v891
    %v1260 = vpack.c.b16 %v896, %v892
    %v1261 = vpack.c.b16 %v901, %v897
    %v1262 = vpack.c.b16 %v902, %v898
    %v1263 = vpack.c.b16 %v903, %v899
    %v1264 = vpack.c.b16 %v904, %v900
    %v1265 = vpack.c.b16 %v909, %v905
    %v1266 = vpack.c.b16 %v910, %v906
    %v1267 = vpack.c.b16 %v911, %v907
    %v1268 = vpack.c.b16 %v912, %v908
    %v1269 = vpack.c.b16 %v917, %v913
    %v1270 = vpack.c.b16 %v918, %v914
    %v1271 = vpack.c.b16 %v919, %v915
    %v1272 = vpack.c.b16 %v920, %v916
    %v1273 = vpack.c.b16 %v925, %v921
    %v1274 = vpack.c.b16 %v926, %v922
    %v1275 = vpack.c.b16 %v927, %v923
    %v1276 = vpack.c.b16 %v928, %v924
    %v1277 = vpack.c.b16 %v933, %v929
    %v1278 = vpack.c.b16 %v934, %v930
    %v1279 = vpack.c.b16 %v935, %v931
    %v1280 = vpack.c.b16 %v936, %v932
    %v1281 = vpack.c.b16 %v941, %v937
    %v1282 = vpack.c.b16 %v942, %v938
    %v1283 = vpack.c.b16 %v943, %v939
    %v1284 = vpack.c.b16 %v944, %v940
    %v1285 = vpack.c.b16 %v949, %v945
    %v1286 = vpack.c.b16 %v950, %v946
    %v1287 = vpack.c.b16 %v951, %v947
    %v1288 = vpack.c.b16 %v952, %v948
    %v1289 = vpack.c.b16 %v957, %v953
    %v1290 = vpack.c.b16 %v958, %v954
    %v1291 = vpack.c.b16 %v959, %v955
    %v1292 = vpack.c.b16 %v960, %v956
    %v1293 = vpack.c.b16 %v965, %v961
    %v1294 = vpack.c.b16 %v966, %v962
    %v1295 = vpack.c.b16 %v967, %v963
    %v1296 = vpack.c.b16 %v968, %v964
    %v1297 = vpack.c.b16 %v973, %v969
    %v1298 = vpack.c.b16 %v974, %v970
    %v1299 = vpack.c.b16 %v975, %v971
    %v1300 = vpack.c.b16 %v976, %v972
    %v1301 = vpack.c.b16 %v981, %v977
    %v1302 = vpack.c.b16 %v982, %v978
    %v1303 = vpack.c.b16 %v983, %v979
    %v1304 = vpack.c.b16 %v984, %v980
    %v1305 = vpack.c.b16 %v989, %v985
    %v1306 = vpack.c.b16 %v990, %v986
    %v1307 = vpack.c.b16 %v991, %v987
    %v1308 = vpack.c.b16 %v992, %v988
    %v1309 = vpack.c.b16 %v997, %v993
    %v1310 = vpack.c.b16 %v998, %v994
    %v1311 = vpack.c.b16 %v999, %v995
    %v1312 = vpack.c.b16 %v1000, %v996
    %v1313 = vpack.c.b16 %v1005, %v1001
    %v1314 = vpack.c.b16 %v1006, %v1002
    %v1315 = vpack.c.b16 %v1007, %v1003
    %v1316 = vpack.c.b16 %v1008, %v1004
    %v1317 = vpack.c.b16 %v1013, %v1009
    %v1318 = vpack.c.b16 %v1014, %v1010
    %v1319 = vpack.c.b16 %v1015, %v1011
    %v1320 = vpack.c.b16 %v1016, %v1012
    %v1321 = vpack.c.b16 %v1021, %v1017
    %v1322 = vpack.c.b16 %v1022, %v1018
    %v1323 = vpack.c.b16 %v1023, %v1019
    %v1324 = vpack.c.b16 %v1024, %v1020
    %v1325 = vpack.c.b16 %v1029, %v1025
    %v1326 = vpack.c.b16 %v1030, %v1026
    %v1327 = vpack.c.b16 %v1031, %v1027
    %v1328 = vpack.c.b16 %v1032, %v1028
    %v1329 = vpack.c.b16 %v1037, %v1033
    %v1330 = vpack.c.b16 %v1038, %v1034
    %v1331 = vpack.c.b16 %v1039, %v1035
    %v1332 = vpack.c.b16 %v1040, %v1036
    %v1333 = vpack.c.b16 %v1045, %v1041
    %v1334 = vpack.c.b16 %v1046, %v1042
    %v1335 = vpack.c.b16 %v1047, %v1043
    %v1336 = vpack.c.b16 %v1048, %v1044
    %v1337 = vpack.c.b16 %v1053, %v1049
    %v1338 = vpack.c.b16 %v1054, %v1050
    %v1339 = vpack.c.b16 %v1055, %v1051
    %v1340 = vpack.c.b16 %v1056, %v1052
    %v1341 = vpack.c.b16 %v1061, %v1057
    %v1342 = vpack.c.b16 %v1062, %v1058
    %v1343 = vpack.c.b16 %v1063, %v1059
    %v1344 = vpack.c.b16 %v1064, %v1060
    %v1345 = vpack.c.b16 %v1069, %v1065
    %v1346 = vpack.c.b16 %v1070, %v1066
    %v1347 = vpack.c.b16 %v1071, %v1067
    %v1348 = vpack.c.b16 %v1072, %v1068
    %v1349 = vpack.c.b16 %v1077, %v1073
    %v1350 = vpack.c.b16 %v1078, %v1074
    %v1351 = vpack.c.b16 %v1079, %v1075
    %v1352 = vpack.c.b16 %v1080, %v1076
    %v1353 = vpack.c.b16 %v1085, %v1081
    %v1354 = vpack.c.b16 %v1086, %v1082
    %v1355 = vpack.c.b16 %v1087, %v1083
    %v1356 = vpack.c.b16 %v1088, %v1084
    %v1357 = vpack.c.b16 %v1093, %v1089
    %v1358 = vpack.c.b16 %v1094, %v1090
    %v1359 = vpack.c.b16 %v1095, %v1091
    %v1360 = vpack.c.b16 %v1096, %v1092
    %v1361 = vpack.c.b16 %v1101, %v1097
    %v1362 = vpack.c.b16 %v1102, %v1098
    %v1363 = vpack.c.b16 %v1103, %v1099
    %v1364 = vpack.c.b16 %v1104, %v1100
    %v1365 = vpack.c.b16 %v1109, %v1105
    %v1366 = vpack.c.b16 %v1110, %v1106
    %v1367 = vpack.c.b16 %v1111, %v1107
    %v1368 = vpack.c.b16 %v1112, %v1108
    %1625 = vmatpush.bf16.msra.mxu0 %v1141
    %1626 = vmatpush.bf16.msra.mxu0 %v1137
    %1627 = vmatpush.bf16.msra.mxu0 %v1133
    %1628 = vmatpush.bf16.msra.mxu0 %v1129
    %1629 = vmatpush.bf16.msra.mxu0 %v1125
    %1630 = vmatpush.bf16.msra.mxu0 %v1121
    %1631 = vmatpush.bf16.msra.mxu0 %v1117
    %1632 = vmatpush.bf16.msra.mxu0 %v1113
    %1633 = vmatmul.bf16.gmra.mxu0 %v71
    %v1634 = vpop.f32.mrf.mxu0
    %v1635 = vadd.f32 %v337, %v1634
    %v1636 = vpop.f32.mrf.mxu0
    %1637 = vdwg.mxu0
    %1638 = vmatpush.bf16.msra.mxu0 %v1173
    %1639 = vmatpush.bf16.msra.mxu0 %v1169
    %1640 = vmatpush.bf16.msra.mxu0 %v1165
    %1641 = vmatpush.bf16.msra.mxu0 %v1161
    %1642 = vmatpush.bf16.msra.mxu0 %v1157
    %1643 = vmatpush.bf16.msra.mxu0 %v1153
    %1644 = vmatpush.bf16.msra.mxu0 %v1149
    %1645 = vmatpush.bf16.msra.mxu0 %v1145
    %1646 = vmatmul.bf16.gmra.mxu0 %v72
    %v1647 = vpop.f32.mrf.mxu0
    %v1648 = vadd.f32 %v1635, %v1647
    %v1649 = vpop.f32.mrf.mxu0
    %1650 = vdwg.mxu0
    %1651 = vmatpush.bf16.msra.mxu0 %v1205
    %1652 = vmatpush.bf16.msra.mxu0 %v1201
    %1653 = vmatpush.bf16.msra.mxu0 %v1197
    %1654 = vmatpush.bf16.msra.mxu0 %v1193
    %1655 = vmatpush.bf16.msra.mxu0 %v1189
    %1656 = vmatpush.bf16.msra.mxu0 %v1185
    %1657 = vmatpush.bf16.msra.mxu0 %v1181
    %1658 = vmatpush.bf16.msra.mxu0 %v1177
    %1659 = vmatmul.bf16.gmra.mxu0 %v73
    %v1660 = vpop.f32.mrf.mxu0
    %v1661 = vadd.f32 %v1648, %v1660
    %v1662 = vpop.f32.mrf.mxu0
    %1663 = vdwg.mxu0
    %1664 = vmatpush.bf16.msra.mxu0 %v1237
    %1665 = vmatpush.bf16.msra.mxu0 %v1233
    %1666 = vmatpush.bf16.msra.mxu0 %v1229
    %1667 = vmatpush.bf16.msra.mxu0 %v1225
    %1668 = vmatpush.bf16.msra.mxu0 %v1221
    %1669 = vmatpush.bf16.msra.mxu0 %v1217
    %1670 = vmatpush.bf16.msra.mxu0 %v1213
    %1671 = vmatpush.bf16.msra.mxu0 %v1209
    %1672 = vmatmul.bf16.gmra.mxu0 %v74
    %v1673 = vpop.f32.mrf.mxu0
    %v1674 = vadd.f32 %v1661, %v1673
    %v1675 = vpop.f32.mrf.mxu0
    %1676 = vdwg.mxu0
    %1677 = vmatpush.bf16.msra.mxu0 %v1269
    %1678 = vmatpush.bf16.msra.mxu0 %v1265
    %1679 = vmatpush.bf16.msra.mxu0 %v1261
    %1680 = vmatpush.bf16.msra.mxu0 %v1257
    %1681 = vmatpush.bf16.msra.mxu0 %v1253
    %1682 = vmatpush.bf16.msra.mxu0 %v1249
    %1683 = vmatpush.bf16.msra.mxu0 %v1245
    %1684 = vmatpush.bf16.msra.mxu0 %v1241
    %1685 = vmatmul.bf16.gmra.mxu0 %v75
    %v1686 = vpop.f32.mrf.mxu0
    %v1687 = vadd.f32 %v1674, %v1686
    %v1688 = vpop.f32.mrf.mxu0
    %1689 = vdwg.mxu0
    %1690 = vmatpush.bf16.msra.mxu0 %v1301
    %1691 = vmatpush.bf16.msra.mxu0 %v1297
    %1692 = vmatpush.bf16.msra.mxu0 %v1293
    %1693 = vmatpush.bf16.msra.mxu0 %v1289
    %1694 = vmatpush.bf16.msra.mxu0 %v1285
    %1695 = vmatpush.bf16.msra.mxu0 %v1281
    %1696 = vmatpush.bf16.msra.mxu0 %v1277
    %1697 = vmatpush.bf16.msra.mxu0 %v1273
    %1698 = vmatmul.bf16.gmra.mxu0 %v76
    %v1699 = vpop.f32.mrf.mxu0
    %v1700 = vadd.f32 %v1687, %v1699
    %v1701 = vpop.f32.mrf.mxu0
    %1702 = vdwg.mxu0
    %1703 = vmatpush.bf16.msra.mxu0 %v1333
    %1704 = vmatpush.bf16.msra.mxu0 %v1329
    %1705 = vmatpush.bf16.msra.mxu0 %v1325
    %1706 = vmatpush.bf16.msra.mxu0 %v1321
    %1707 = vmatpush.bf16.msra.mxu0 %v1317
    %1708 = vmatpush.bf16.msra.mxu0 %v1313
    %1709 = vmatpush.bf16.msra.mxu0 %v1309
    %1710 = vmatpush.bf16.msra.mxu0 %v1305
    %1711 = vmatmul.bf16.gmra.mxu0 %v77
    %v1712 = vpop.f32.mrf.mxu0
    %v1713 = vadd.f32 %v1700, %v1712
    %v1714 = vpop.f32.mrf.mxu0
    %1715 = vdwg.mxu0
    %1716 = vmatpush.bf16.msra.mxu0 %v1365
    %1717 = vmatpush.bf16.msra.mxu0 %v1361
    %1718 = vmatpush.bf16.msra.mxu0 %v1357
    %1719 = vmatpush.bf16.msra.mxu0 %v1353
    %1720 = vmatpush.bf16.msra.mxu0 %v1349
    %1721 = vmatpush.bf16.msra.mxu0 %v1345
    %1722 = vmatpush.bf16.msra.mxu0 %v1341
    %1723 = vmatpush.bf16.msra.mxu0 %v1337
    %1724 = vmatmul.bf16.gmra.mxu0 %v78
    %v1725 = vpop.f32.mrf.mxu0
    %v1726 = vadd.f32 %v1713, %v1725
    %v1727 = vpop.f32.mrf.mxu0
    %1728 = vdwg.mxu0
    %1729 = vmatpush.bf16.msra.mxu0 %v1142
    %1730 = vmatpush.bf16.msra.mxu0 %v1138
    %1731 = vmatpush.bf16.msra.mxu0 %v1134
    %1732 = vmatpush.bf16.msra.mxu0 %v1130
    %1733 = vmatpush.bf16.msra.mxu0 %v1126
    %1734 = vmatpush.bf16.msra.mxu0 %v1122
    %1735 = vmatpush.bf16.msra.mxu0 %v1118
    %1736 = vmatpush.bf16.msra.mxu0 %v1114
    %1737 = vmatmul.bf16.gmra.mxu0 %v71
    %v1738 = vpop.f32.mrf.mxu0
    %v1739 = vadd.f32 %v338, %v1738
    %v1740 = vpop.f32.mrf.mxu0
    %1741 = vdwg.mxu0
    %1742 = vmatpush.bf16.msra.mxu0 %v1174
    %1743 = vmatpush.bf16.msra.mxu0 %v1170
    %1744 = vmatpush.bf16.msra.mxu0 %v1166
    %1745 = vmatpush.bf16.msra.mxu0 %v1162
    %1746 = vmatpush.bf16.msra.mxu0 %v1158
    %1747 = vmatpush.bf16.msra.mxu0 %v1154
    %1748 = vmatpush.bf16.msra.mxu0 %v1150
    %1749 = vmatpush.bf16.msra.mxu0 %v1146
    %1750 = vmatmul.bf16.gmra.mxu0 %v72
    %v1751 = vpop.f32.mrf.mxu0
    %v1752 = vadd.f32 %v1739, %v1751
    %v1753 = vpop.f32.mrf.mxu0
    %1754 = vdwg.mxu0
    %1755 = vmatpush.bf16.msra.mxu0 %v1206
    %1756 = vmatpush.bf16.msra.mxu0 %v1202
    %1757 = vmatpush.bf16.msra.mxu0 %v1198
    %1758 = vmatpush.bf16.msra.mxu0 %v1194
    %1759 = vmatpush.bf16.msra.mxu0 %v1190
    %1760 = vmatpush.bf16.msra.mxu0 %v1186
    %1761 = vmatpush.bf16.msra.mxu0 %v1182
    %1762 = vmatpush.bf16.msra.mxu0 %v1178
    %1763 = vmatmul.bf16.gmra.mxu0 %v73
    %v1764 = vpop.f32.mrf.mxu0
    %v1765 = vadd.f32 %v1752, %v1764
    %v1766 = vpop.f32.mrf.mxu0
    %1767 = vdwg.mxu0
    %1768 = vmatpush.bf16.msra.mxu0 %v1238
    %1769 = vmatpush.bf16.msra.mxu0 %v1234
    %1770 = vmatpush.bf16.msra.mxu0 %v1230
    %1771 = vmatpush.bf16.msra.mxu0 %v1226
    %1772 = vmatpush.bf16.msra.mxu0 %v1222
    %1773 = vmatpush.bf16.msra.mxu0 %v1218
    %1774 = vmatpush.bf16.msra.mxu0 %v1214
    %1775 = vmatpush.bf16.msra.mxu0 %v1210
    %1776 = vmatmul.bf16.gmra.mxu0 %v74
    %v1777 = vpop.f32.mrf.mxu0
    %v1778 = vadd.f32 %v1765, %v1777
    %v1779 = vpop.f32.mrf.mxu0
    %1780 = vdwg.mxu0
    %1781 = vmatpush.bf16.msra.mxu0 %v1270
    %1782 = vmatpush.bf16.msra.mxu0 %v1266
    %1783 = vmatpush.bf16.msra.mxu0 %v1262
    %1784 = vmatpush.bf16.msra.mxu0 %v1258
    %1785 = vmatpush.bf16.msra.mxu0 %v1254
    %1786 = vmatpush.bf16.msra.mxu0 %v1250
    %1787 = vmatpush.bf16.msra.mxu0 %v1246
    %1788 = vmatpush.bf16.msra.mxu0 %v1242
    %1789 = vmatmul.bf16.gmra.mxu0 %v75
    %v1790 = vpop.f32.mrf.mxu0
    %v1791 = vadd.f32 %v1778, %v1790
    %v1792 = vpop.f32.mrf.mxu0
    %1793 = vdwg.mxu0
    %1794 = vmatpush.bf16.msra.mxu0 %v1302
    %1795 = vmatpush.bf16.msra.mxu0 %v1298
    %1796 = vmatpush.bf16.msra.mxu0 %v1294
    %1797 = vmatpush.bf16.msra.mxu0 %v1290
    %1798 = vmatpush.bf16.msra.mxu0 %v1286
    %1799 = vmatpush.bf16.msra.mxu0 %v1282
    %1800 = vmatpush.bf16.msra.mxu0 %v1278
    %1801 = vmatpush.bf16.msra.mxu0 %v1274
    %1802 = vmatmul.bf16.gmra.mxu0 %v76
    %v1803 = vpop.f32.mrf.mxu0
    %v1804 = vadd.f32 %v1791, %v1803
    %v1805 = vpop.f32.mrf.mxu0
    %1806 = vdwg.mxu0
    %1807 = vmatpush.bf16.msra.mxu0 %v1334
    %1808 = vmatpush.bf16.msra.mxu0 %v1330
    %1809 = vmatpush.bf16.msra.mxu0 %v1326
    %1810 = vmatpush.bf16.msra.mxu0 %v1322
    %1811 = vmatpush.bf16.msra.mxu0 %v1318
    %1812 = vmatpush.bf16.msra.mxu0 %v1314
    %1813 = vmatpush.bf16.msra.mxu0 %v1310
    %1814 = vmatpush.bf16.msra.mxu0 %v1306
    %1815 = vmatmul.bf16.gmra.mxu0 %v77
    %v1816 = vpop.f32.mrf.mxu0
    %v1817 = vadd.f32 %v1804, %v1816
    %v1818 = vpop.f32.mrf.mxu0
    %1819 = vdwg.mxu0
    %1820 = vmatpush.bf16.msra.mxu0 %v1366
    %1821 = vmatpush.bf16.msra.mxu0 %v1362
    %1822 = vmatpush.bf16.msra.mxu0 %v1358
    %1823 = vmatpush.bf16.msra.mxu0 %v1354
    %1824 = vmatpush.bf16.msra.mxu0 %v1350
    %1825 = vmatpush.bf16.msra.mxu0 %v1346
    %1826 = vmatpush.bf16.msra.mxu0 %v1342
    %1827 = vmatpush.bf16.msra.mxu0 %v1338
    %1828 = vmatmul.bf16.gmra.mxu0 %v78
    %v1829 = vpop.f32.mrf.mxu0
    %v1830 = vadd.f32 %v1817, %v1829
    %v1831 = vpop.f32.mrf.mxu0
    %1832 = vdwg.mxu0
    %1833 = vmatpush.bf16.msra.mxu0 %v1143
    %1834 = vmatpush.bf16.msra.mxu0 %v1139
    %1835 = vmatpush.bf16.msra.mxu0 %v1135
    %1836 = vmatpush.bf16.msra.mxu0 %v1131
    %1837 = vmatpush.bf16.msra.mxu0 %v1127
    %1838 = vmatpush.bf16.msra.mxu0 %v1123
    %1839 = vmatpush.bf16.msra.mxu0 %v1119
    %1840 = vmatpush.bf16.msra.mxu0 %v1115
    %1841 = vmatmul.bf16.gmra.mxu0 %v71
    %v1842 = vpop.f32.mrf.mxu0
    %v1843 = vadd.f32 %v339, %v1842
    %v1844 = vpop.f32.mrf.mxu0
    %1845 = vdwg.mxu0
    %1846 = vmatpush.bf16.msra.mxu0 %v1175
    %1847 = vmatpush.bf16.msra.mxu0 %v1171
    %1848 = vmatpush.bf16.msra.mxu0 %v1167
    %1849 = vmatpush.bf16.msra.mxu0 %v1163
    %1850 = vmatpush.bf16.msra.mxu0 %v1159
    %1851 = vmatpush.bf16.msra.mxu0 %v1155
    %1852 = vmatpush.bf16.msra.mxu0 %v1151
    %1853 = vmatpush.bf16.msra.mxu0 %v1147
    %1854 = vmatmul.bf16.gmra.mxu0 %v72
    %v1855 = vpop.f32.mrf.mxu0
    %v1856 = vadd.f32 %v1843, %v1855
    %v1857 = vpop.f32.mrf.mxu0
    %1858 = vdwg.mxu0
    %1859 = vmatpush.bf16.msra.mxu0 %v1207
    %1860 = vmatpush.bf16.msra.mxu0 %v1203
    %1861 = vmatpush.bf16.msra.mxu0 %v1199
    %1862 = vmatpush.bf16.msra.mxu0 %v1195
    %1863 = vmatpush.bf16.msra.mxu0 %v1191
    %1864 = vmatpush.bf16.msra.mxu0 %v1187
    %1865 = vmatpush.bf16.msra.mxu0 %v1183
    %1866 = vmatpush.bf16.msra.mxu0 %v1179
    %1867 = vmatmul.bf16.gmra.mxu0 %v73
    %v1868 = vpop.f32.mrf.mxu0
    %v1869 = vadd.f32 %v1856, %v1868
    %v1870 = vpop.f32.mrf.mxu0
    %1871 = vdwg.mxu0
    %1872 = vmatpush.bf16.msra.mxu0 %v1239
    %1873 = vmatpush.bf16.msra.mxu0 %v1235
    %1874 = vmatpush.bf16.msra.mxu0 %v1231
    %1875 = vmatpush.bf16.msra.mxu0 %v1227
    %1876 = vmatpush.bf16.msra.mxu0 %v1223
    %1877 = vmatpush.bf16.msra.mxu0 %v1219
    %1878 = vmatpush.bf16.msra.mxu0 %v1215
    %1879 = vmatpush.bf16.msra.mxu0 %v1211
    %1880 = vmatmul.bf16.gmra.mxu0 %v74
    %v1881 = vpop.f32.mrf.mxu0
    %v1882 = vadd.f32 %v1869, %v1881
    %v1883 = vpop.f32.mrf.mxu0
    %1884 = vdwg.mxu0
    %1885 = vmatpush.bf16.msra.mxu0 %v1271
    %1886 = vmatpush.bf16.msra.mxu0 %v1267
    %1887 = vmatpush.bf16.msra.mxu0 %v1263
    %1888 = vmatpush.bf16.msra.mxu0 %v1259
    %1889 = vmatpush.bf16.msra.mxu0 %v1255
    %1890 = vmatpush.bf16.msra.mxu0 %v1251
    %1891 = vmatpush.bf16.msra.mxu0 %v1247
    %1892 = vmatpush.bf16.msra.mxu0 %v1243
    %1893 = vmatmul.bf16.gmra.mxu0 %v75
    %v1894 = vpop.f32.mrf.mxu0
    %v1895 = vadd.f32 %v1882, %v1894
    %v1896 = vpop.f32.mrf.mxu0
    %1897 = vdwg.mxu0
    %1898 = vmatpush.bf16.msra.mxu0 %v1303
    %1899 = vmatpush.bf16.msra.mxu0 %v1299
    %1900 = vmatpush.bf16.msra.mxu0 %v1295
    %1901 = vmatpush.bf16.msra.mxu0 %v1291
    %1902 = vmatpush.bf16.msra.mxu0 %v1287
    %1903 = vmatpush.bf16.msra.mxu0 %v1283
    %1904 = vmatpush.bf16.msra.mxu0 %v1279
    %1905 = vmatpush.bf16.msra.mxu0 %v1275
    %1906 = vmatmul.bf16.gmra.mxu0 %v76
    %v1907 = vpop.f32.mrf.mxu0
    %v1908 = vadd.f32 %v1895, %v1907
    %v1909 = vpop.f32.mrf.mxu0
    %1910 = vdwg.mxu0
    %1911 = vmatpush.bf16.msra.mxu0 %v1335
    %1912 = vmatpush.bf16.msra.mxu0 %v1331
    %1913 = vmatpush.bf16.msra.mxu0 %v1327
    %1914 = vmatpush.bf16.msra.mxu0 %v1323
    %1915 = vmatpush.bf16.msra.mxu0 %v1319
    %1916 = vmatpush.bf16.msra.mxu0 %v1315
    %1917 = vmatpush.bf16.msra.mxu0 %v1311
    %1918 = vmatpush.bf16.msra.mxu0 %v1307
    %1919 = vmatmul.bf16.gmra.mxu0 %v77
    %v1920 = vpop.f32.mrf.mxu0
    %v1921 = vadd.f32 %v1908, %v1920
    %v1922 = vpop.f32.mrf.mxu0
    %1923 = vdwg.mxu0
    %1924 = vmatpush.bf16.msra.mxu0 %v1367
    %1925 = vmatpush.bf16.msra.mxu0 %v1363
    %1926 = vmatpush.bf16.msra.mxu0 %v1359
    %1927 = vmatpush.bf16.msra.mxu0 %v1355
    %1928 = vmatpush.bf16.msra.mxu0 %v1351
    %1929 = vmatpush.bf16.msra.mxu0 %v1347
    %1930 = vmatpush.bf16.msra.mxu0 %v1343
    %1931 = vmatpush.bf16.msra.mxu0 %v1339
    %1932 = vmatmul.bf16.gmra.mxu0 %v78
    %v1933 = vpop.f32.mrf.mxu0
    %v1934 = vadd.f32 %v1921, %v1933
    %v1935 = vpop.f32.mrf.mxu0
    %1936 = vdwg.mxu0
    %1937 = vmatpush.bf16.msra.mxu0 %v1144
    %1938 = vmatpush.bf16.msra.mxu0 %v1140
    %1939 = vmatpush.bf16.msra.mxu0 %v1136
    %1940 = vmatpush.bf16.msra.mxu0 %v1132
    %1941 = vmatpush.bf16.msra.mxu0 %v1128
    %1942 = vmatpush.bf16.msra.mxu0 %v1124
    %1943 = vmatpush.bf16.msra.mxu0 %v1120
    %1944 = vmatpush.bf16.msra.mxu0 %v1116
    %1945 = vmatmul.bf16.gmra.mxu0 %v71
    %v1946 = vpop.f32.mrf.mxu0
    %v1947 = vadd.f32 %v340, %v1946
    %v1948 = vpop.f32.mrf.mxu0
    %1949 = vdwg.mxu0
    %1950 = vmatpush.bf16.msra.mxu0 %v1176
    %1951 = vmatpush.bf16.msra.mxu0 %v1172
    %1952 = vmatpush.bf16.msra.mxu0 %v1168
    %1953 = vmatpush.bf16.msra.mxu0 %v1164
    %1954 = vmatpush.bf16.msra.mxu0 %v1160
    %1955 = vmatpush.bf16.msra.mxu0 %v1156
    %1956 = vmatpush.bf16.msra.mxu0 %v1152
    %1957 = vmatpush.bf16.msra.mxu0 %v1148
    %1958 = vmatmul.bf16.gmra.mxu0 %v72
    %v1959 = vpop.f32.mrf.mxu0
    %v1960 = vadd.f32 %v1947, %v1959
    %v1961 = vpop.f32.mrf.mxu0
    %1962 = vdwg.mxu0
    %1963 = vmatpush.bf16.msra.mxu0 %v1208
    %1964 = vmatpush.bf16.msra.mxu0 %v1204
    %1965 = vmatpush.bf16.msra.mxu0 %v1200
    %1966 = vmatpush.bf16.msra.mxu0 %v1196
    %1967 = vmatpush.bf16.msra.mxu0 %v1192
    %1968 = vmatpush.bf16.msra.mxu0 %v1188
    %1969 = vmatpush.bf16.msra.mxu0 %v1184
    %1970 = vmatpush.bf16.msra.mxu0 %v1180
    %1971 = vmatmul.bf16.gmra.mxu0 %v73
    %v1972 = vpop.f32.mrf.mxu0
    %v1973 = vadd.f32 %v1960, %v1972
    %v1974 = vpop.f32.mrf.mxu0
    %1975 = vdwg.mxu0
    %1976 = vmatpush.bf16.msra.mxu0 %v1240
    %1977 = vmatpush.bf16.msra.mxu0 %v1236
    %1978 = vmatpush.bf16.msra.mxu0 %v1232
    %1979 = vmatpush.bf16.msra.mxu0 %v1228
    %1980 = vmatpush.bf16.msra.mxu0 %v1224
    %1981 = vmatpush.bf16.msra.mxu0 %v1220
    %1982 = vmatpush.bf16.msra.mxu0 %v1216
    %1983 = vmatpush.bf16.msra.mxu0 %v1212
    %1984 = vmatmul.bf16.gmra.mxu0 %v74
    %v1985 = vpop.f32.mrf.mxu0
    %v1986 = vadd.f32 %v1973, %v1985
    %v1987 = vpop.f32.mrf.mxu0
    %1988 = vdwg.mxu0
    %1989 = vmatpush.bf16.msra.mxu0 %v1272
    %1990 = vmatpush.bf16.msra.mxu0 %v1268
    %1991 = vmatpush.bf16.msra.mxu0 %v1264
    %1992 = vmatpush.bf16.msra.mxu0 %v1260
    %1993 = vmatpush.bf16.msra.mxu0 %v1256
    %1994 = vmatpush.bf16.msra.mxu0 %v1252
    %1995 = vmatpush.bf16.msra.mxu0 %v1248
    %1996 = vmatpush.bf16.msra.mxu0 %v1244
    %1997 = vmatmul.bf16.gmra.mxu0 %v75
    %v1998 = vpop.f32.mrf.mxu0
    %v1999 = vadd.f32 %v1986, %v1998
    %v2000 = vpop.f32.mrf.mxu0
    %2001 = vdwg.mxu0
    %2002 = vmatpush.bf16.msra.mxu0 %v1304
    %2003 = vmatpush.bf16.msra.mxu0 %v1300
    %2004 = vmatpush.bf16.msra.mxu0 %v1296
    %2005 = vmatpush.bf16.msra.mxu0 %v1292
    %2006 = vmatpush.bf16.msra.mxu0 %v1288
    %2007 = vmatpush.bf16.msra.mxu0 %v1284
    %2008 = vmatpush.bf16.msra.mxu0 %v1280
    %2009 = vmatpush.bf16.msra.mxu0 %v1276
    %2010 = vmatmul.bf16.gmra.mxu0 %v76
    %v2011 = vpop.f32.mrf.mxu0
    %v2012 = vadd.f32 %v1999, %v2011
    %v2013 = vpop.f32.mrf.mxu0
    %2014 = vdwg.mxu0
    %2015 = vmatpush.bf16.msra.mxu0 %v1336
    %2016 = vmatpush.bf16.msra.mxu0 %v1332
    %2017 = vmatpush.bf16.msra.mxu0 %v1328
    %2018 = vmatpush.bf16.msra.mxu0 %v1324
    %2019 = vmatpush.bf16.msra.mxu0 %v1320
    %2020 = vmatpush.bf16.msra.mxu0 %v1316
    %2021 = vmatpush.bf16.msra.mxu0 %v1312
    %2022 = vmatpush.bf16.msra.mxu0 %v1308
    %2023 = vmatmul.bf16.gmra.mxu0 %v77
    %v2024 = vpop.f32.mrf.mxu0
    %v2025 = vadd.f32 %v2012, %v2024
    %v2026 = vpop.f32.mrf.mxu0
    %2027 = vdwg.mxu0
    %2028 = vmatpush.bf16.msra.mxu0 %v1368
    %2029 = vmatpush.bf16.msra.mxu0 %v1364
    %2030 = vmatpush.bf16.msra.mxu0 %v1360
    %2031 = vmatpush.bf16.msra.mxu0 %v1356
    %2032 = vmatpush.bf16.msra.mxu0 %v1352
    %2033 = vmatpush.bf16.msra.mxu0 %v1348
    %2034 = vmatpush.bf16.msra.mxu0 %v1344
    %2035 = vmatpush.bf16.msra.mxu0 %v1340
    %2036 = vmatmul.bf16.gmra.mxu0 %v78
    %v2037 = vpop.f32.mrf.mxu0
    %v2038 = vadd.f32 %v2025, %v2037
    %v2039 = vpop.f32.mrf.mxu0
    %2040 = vdwg.mxu0
    %v2041 = vmul.f32 %v1726, 0.2
    %v2042 = vmul.f32 %v1830, 0.2
    %v2043 = vmul.f32 %v1934, 0.2
    %v2044 = vmul.f32 %v2038, 0.2
    %v2045 = vmax.f32 %v1726, %v2041
    %v2046 = vmax.f32 %v1830, %v2042
    %v2047 = vmax.f32 %v1934, %v2043
    %v2048 = vmax.f32 %v2038, %v2044
    %v2049 = vpack.c.bf16 %v2045, %v2045
    %v2050 = vpack.c.bf16 %v2046, %v2046
    %v2051 = vpack.c.bf16 %v2047, %v2047
    %v2052 = vpack.c.bf16 %v2048, %v2048
    %v2053 = vld [vmem:[%s3] sm:$0xff]
    %v2054 = vld [vmem:[%s3 + $0x8] sm:$0xff]
    %v2055 = vld [vmem:[%s3 + $0x10] sm:$0xff]
    %v2056 = vld [vmem:[%s3 + $0x18] sm:$0xff]
    %v2057 = vld [vmem:[%s3 + $0x20] sm:$0xff]
    %v2058 = vld [vmem:[%s3 + $0x28] sm:$0xff]
    %v2059 = vld [vmem:[%s3 + $0x30] sm:$0xff]
    %v2060 = vld [vmem:[%s3 + $0x38] sm:$0xff]
    %v2061 = vld [vmem:[%s3 + $0x40] sm:$0xff]
    %v2062 = vld [vmem:[%s3 + $0x48] sm:$0xff]
    %v2063 = vld [vmem:[%s3 + $0x50] sm:$0xff]
    %v2064 = vld [vmem:[%s3 + $0x58] sm:$0xff]
    %v2065 = vld [vmem:[%s3 + $0x60] sm:$0xff]
    %v2066 = vld [vmem:[%s3 + $0x68] sm:$0xff]
    %v2067 = vld [vmem:[%s3 + $0x70] sm:$0xff]
    %v2068 = vld [vmem:[%s3 + $0x78] sm:$0xff]
    %v2069 = vld [vmem:[%s3 + $0x80] sm:$0xff]
    %v2070 = vld [vmem:[%s3 + $0x88] sm:$0xff]
    %v2071 = vld [vmem:[%s3 + $0x90] sm:$0xff]
    %v2072 = vld [vmem:[%s3 + $0x98] sm:$0xff]
    %v2073 = vld [vmem:[%s3 + $0xa0] sm:$0xff]
    %v2074 = vld [vmem:[%s3 + $0xa8] sm:$0xff]
    %v2075 = vld [vmem:[%s3 + $0xb0] sm:$0xff]
    %v2076 = vld [vmem:[%s3 + $0xb8] sm:$0xff]
    %v2077 = vld [vmem:[%s3 + $0xc0] sm:$0xff]
    %v2078 = vld [vmem:[%s3 + $0xc8] sm:$0xff]
    %v2079 = vld [vmem:[%s3 + $0xd0] sm:$0xff]
    %v2080 = vld [vmem:[%s3 + $0xd8] sm:$0xff]
    %v2081 = vld [vmem:[%s3 + $0xe0] sm:$0xff]
    %v2082 = vld [vmem:[%s3 + $0xe8] sm:$0xff]
    %v2083 = vld [vmem:[%s3 + $0xf0] sm:$0xff]
    %v2084 = vld [vmem:[%s3 + $0xf8] sm:$0xff]
    %v2085 = vld [vmem:[%s3 + $0x100] sm:$0xff]
    %v2086 = vld [vmem:[%s3 + $0x108] sm:$0xff]
    %v2087 = vld [vmem:[%s3 + $0x110] sm:$0xff]
    %v2088 = vld [vmem:[%s3 + $0x118] sm:$0xff]
    %v2089 = vld [vmem:[%s3 + $0x120] sm:$0xff]
    %v2090 = vld [vmem:[%s3 + $0x128] sm:$0xff]
    %v2091 = vld [vmem:[%s3 + $0x130] sm:$0xff]
    %v2092 = vld [vmem:[%s3 + $0x138] sm:$0xff]
    %v2093 = vld [vmem:[%s3 + $0x140] sm:$0xff]
    %v2094 = vld [vmem:[%s3 + $0x148] sm:$0xff]
    %v2095 = vld [vmem:[%s3 + $0x150] sm:$0xff]
    %v2096 = vld [vmem:[%s3 + $0x158] sm:$0xff]
    %v2097 = vld [vmem:[%s3 + $0x160] sm:$0xff]
    %v2098 = vld [vmem:[%s3 + $0x168] sm:$0xff]
    %v2099 = vld [vmem:[%s3 + $0x170] sm:$0xff]
    %v2100 = vld [vmem:[%s3 + $0x178] sm:$0xff]
    %v2101 = vld [vmem:[%s3 + $0x180] sm:$0xff]
    %v2102 = vld [vmem:[%s3 + $0x188] sm:$0xff]
    %v2103 = vld [vmem:[%s3 + $0x190] sm:$0xff]
    %v2104 = vld [vmem:[%s3 + $0x198] sm:$0xff]
    %v2105 = vld [vmem:[%s3 + $0x1a0] sm:$0xff]
    %v2106 = vld [vmem:[%s3 + $0x1a8] sm:$0xff]
    %v2107 = vld [vmem:[%s3 + $0x1b0] sm:$0xff]
    %v2108 = vld [vmem:[%s3 + $0x1b8] sm:$0xff]
    %v2109 = vld [vmem:[%s3 + $0x1c0] sm:$0xff]
    %v2110 = vld [vmem:[%s3 + $0x1c8] sm:$0xff]
    %v2111 = vld [vmem:[%s3 + $0x1d0] sm:$0xff]
    %v2112 = vld [vmem:[%s3 + $0x1d8] sm:$0xff]
    %v2113 = vld [vmem:[%s3 + $0x1e0] sm:$0xff]
    %v2114 = vld [vmem:[%s3 + $0x1e8] sm:$0xff]
    %v2115 = vld [vmem:[%s3 + $0x1f0] sm:$0xff]
    %v2116 = vld [vmem:[%s3 + $0x1f8] sm:$0xff]
    %v2117 = vld [vmem:[%s4] sm:$0x3]
    %v2119 = vperm.slane %v2117, 0
    %v2120 = vperm.slane %v2117, 1
    %v2187 = vunpack.c.l.b16 %v2053
    %v2188 = vunpack.c.h.b16 %v2053
    %v2189 = vunpack.c.l.b16 %v2054
    %v2190 = vunpack.c.h.b16 %v2054
    %v2191 = vunpack.c.l.b16 %v2055
    %v2192 = vunpack.c.h.b16 %v2055
    %v2193 = vunpack.c.l.b16 %v2056
    %v2194 = vunpack.c.h.b16 %v2056
    %v2195 = vunpack.c.l.b16 %v2057
    %v2196 = vunpack.c.h.b16 %v2057
    %v2197 = vunpack.c.l.b16 %v2058
    %v2198 = vunpack.c.h.b16 %v2058
    %v2199 = vunpack.c.l.b16 %v2059
    %v2200 = vunpack.c.h.b16 %v2059
    %v2201 = vunpack.c.l.b16 %v2060
    %v2202 = vunpack.c.h.b16 %v2060
    %v2203 = vunpack.c.l.b16 %v2061
    %v2204 = vunpack.c.h.b16 %v2061
    %v2205 = vunpack.c.l.b16 %v2062
    %v2206 = vunpack.c.h.b16 %v2062
    %v2207 = vunpack.c.l.b16 %v2063
    %v2208 = vunpack.c.h.b16 %v2063
    %v2209 = vunpack.c.l.b16 %v2064
    %v2210 = vunpack.c.h.b16 %v2064
    %v2211 = vunpack.c.l.b16 %v2065
    %v2212 = vunpack.c.h.b16 %v2065
    %v2213 = vunpack.c.l.b16 %v2066
    %v2214 = vunpack.c.h.b16 %v2066
    %v2215 = vunpack.c.l.b16 %v2067
    %v2216 = vunpack.c.h.b16 %v2067
    %v2217 = vunpack.c.l.b16 %v2068
    %v2218 = vunpack.c.h.b16 %v2068
    %v2219 = vunpack.c.l.b16 %v2069
    %v2220 = vunpack.c.h.b16 %v2069
    %v2221 = vunpack.c.l.b16 %v2070
    %v2222 = vunpack.c.h.b16 %v2070
    %v2223 = vunpack.c.l.b16 %v2071
    %v2224 = vunpack.c.h.b16 %v2071
    %v2225 = vunpack.c.l.b16 %v2072
    %v2226 = vunpack.c.h.b16 %v2072
    %v2227 = vunpack.c.l.b16 %v2073
    %v2228 = vunpack.c.h.b16 %v2073
    %v2229 = vunpack.c.l.b16 %v2074
    %v2230 = vunpack.c.h.b16 %v2074
    %v2231 = vunpack.c.l.b16 %v2075
    %v2232 = vunpack.c.h.b16 %v2075
    %v2233 = vunpack.c.l.b16 %v2076
    %v2234 = vunpack.c.h.b16 %v2076
    %v2235 = vunpack.c.l.b16 %v2077
    %v2236 = vunpack.c.h.b16 %v2077
    %v2237 = vunpack.c.l.b16 %v2078
    %v2238 = vunpack.c.h.b16 %v2078
    %v2239 = vunpack.c.l.b16 %v2079
    %v2240 = vunpack.c.h.b16 %v2079
    %v2241 = vunpack.c.l.b16 %v2080
    %v2242 = vunpack.c.h.b16 %v2080
    %v2243 = vunpack.c.l.b16 %v2081
    %v2244 = vunpack.c.h.b16 %v2081
    %v2245 = vunpack.c.l.b16 %v2082
    %v2246 = vunpack.c.h.b16 %v2082
    %v2247 = vunpack.c.l.b16 %v2083
    %v2248 = vunpack.c.h.b16 %v2083
    %v2249 = vunpack.c.l.b16 %v2084
    %v2250 = vunpack.c.h.b16 %v2084
    %v2251 = vunpack.c.l.b16 %v2085
    %v2252 = vunpack.c.h.b16 %v2085
    %v2253 = vunpack.c.l.b16 %v2086
    %v2254 = vunpack.c.h.b16 %v2086
    %v2255 = vunpack.c.l.b16 %v2087
    %v2256 = vunpack.c.h.b16 %v2087
    %v2257 = vunpack.c.l.b16 %v2088
    %v2258 = vunpack.c.h.b16 %v2088
    %v2259 = vunpack.c.l.b16 %v2089
    %v2260 = vunpack.c.h.b16 %v2089
    %v2261 = vunpack.c.l.b16 %v2090
    %v2262 = vunpack.c.h.b16 %v2090
    %v2263 = vunpack.c.l.b16 %v2091
    %v2264 = vunpack.c.h.b16 %v2091
    %v2265 = vunpack.c.l.b16 %v2092
    %v2266 = vunpack.c.h.b16 %v2092
    %v2267 = vunpack.c.l.b16 %v2093
    %v2268 = vunpack.c.h.b16 %v2093
    %v2269 = vunpack.c.l.b16 %v2094
    %v2270 = vunpack.c.h.b16 %v2094
    %v2271 = vunpack.c.l.b16 %v2095
    %v2272 = vunpack.c.h.b16 %v2095
    %v2273 = vunpack.c.l.b16 %v2096
    %v2274 = vunpack.c.h.b16 %v2096
    %v2275 = vunpack.c.l.b16 %v2097
    %v2276 = vunpack.c.h.b16 %v2097
    %v2277 = vunpack.c.l.b16 %v2098
    %v2278 = vunpack.c.h.b16 %v2098
    %v2279 = vunpack.c.l.b16 %v2099
    %v2280 = vunpack.c.h.b16 %v2099
    %v2281 = vunpack.c.l.b16 %v2100
    %v2282 = vunpack.c.h.b16 %v2100
    %v2283 = vunpack.c.l.b16 %v2101
    %v2284 = vunpack.c.h.b16 %v2101
    %v2285 = vunpack.c.l.b16 %v2102
    %v2286 = vunpack.c.h.b16 %v2102
    %v2287 = vunpack.c.l.b16 %v2103
    %v2288 = vunpack.c.h.b16 %v2103
    %v2289 = vunpack.c.l.b16 %v2104
    %v2290 = vunpack.c.h.b16 %v2104
    %v2291 = vunpack.c.l.b16 %v2105
    %v2292 = vunpack.c.h.b16 %v2105
    %v2293 = vunpack.c.l.b16 %v2106
    %v2294 = vunpack.c.h.b16 %v2106
    %v2295 = vunpack.c.l.b16 %v2107
    %v2296 = vunpack.c.h.b16 %v2107
    %v2297 = vunpack.c.l.b16 %v2108
    %v2298 = vunpack.c.h.b16 %v2108
    %v2299 = vunpack.c.l.b16 %v2109
    %v2300 = vunpack.c.h.b16 %v2109
    %v2301 = vunpack.c.l.b16 %v2110
    %v2302 = vunpack.c.h.b16 %v2110
    %v2303 = vunpack.c.l.b16 %v2111
    %v2304 = vunpack.c.h.b16 %v2111
    %v2305 = vunpack.c.l.b16 %v2112
    %v2306 = vunpack.c.h.b16 %v2112
    %v2307 = vunpack.c.l.b16 %v2113
    %v2308 = vunpack.c.h.b16 %v2113
    %v2309 = vunpack.c.l.b16 %v2114
    %v2310 = vunpack.c.h.b16 %v2114
    %v2311 = vunpack.c.l.b16 %v2115
    %v2312 = vunpack.c.h.b16 %v2115
    %v2313 = vunpack.c.l.b16 %v2116
    %v2314 = vunpack.c.h.b16 %v2116
    %v2315 = vpack.c.b16 %v2189, %v2187
    %v2316 = vpack.c.b16 %v2190, %v2188
    %v2317 = vpack.c.b16 %v2193, %v2191
    %v2318 = vpack.c.b16 %v2194, %v2192
    %v2319 = vpack.c.b16 %v2197, %v2195
    %v2320 = vpack.c.b16 %v2198, %v2196
    %v2321 = vpack.c.b16 %v2201, %v2199
    %v2322 = vpack.c.b16 %v2202, %v2200
    %v2323 = vpack.c.b16 %v2205, %v2203
    %v2324 = vpack.c.b16 %v2206, %v2204
    %v2325 = vpack.c.b16 %v2209, %v2207
    %v2326 = vpack.c.b16 %v2210, %v2208
    %v2327 = vpack.c.b16 %v2213, %v2211
    %v2328 = vpack.c.b16 %v2214, %v2212
    %v2329 = vpack.c.b16 %v2217, %v2215
    %v2330 = vpack.c.b16 %v2218, %v2216
    %v2331 = vpack.c.b16 %v2221, %v2219
    %v2332 = vpack.c.b16 %v2222, %v2220
    %v2333 = vpack.c.b16 %v2225, %v2223
    %v2334 = vpack.c.b16 %v2226, %v2224
    %v2335 = vpack.c.b16 %v2229, %v2227
    %v2336 = vpack.c.b16 %v2230, %v2228
    %v2337 = vpack.c.b16 %v2233, %v2231
    %v2338 = vpack.c.b16 %v2234, %v2232
    %v2339 = vpack.c.b16 %v2237, %v2235
    %v2340 = vpack.c.b16 %v2238, %v2236
    %v2341 = vpack.c.b16 %v2241, %v2239
    %v2342 = vpack.c.b16 %v2242, %v2240
    %v2343 = vpack.c.b16 %v2245, %v2243
    %v2344 = vpack.c.b16 %v2246, %v2244
    %v2345 = vpack.c.b16 %v2249, %v2247
    %v2346 = vpack.c.b16 %v2250, %v2248
    %v2347 = vpack.c.b16 %v2253, %v2251
    %v2348 = vpack.c.b16 %v2254, %v2252
    %v2349 = vpack.c.b16 %v2257, %v2255
    %v2350 = vpack.c.b16 %v2258, %v2256
    %v2351 = vpack.c.b16 %v2261, %v2259
    %v2352 = vpack.c.b16 %v2262, %v2260
    %v2353 = vpack.c.b16 %v2265, %v2263
    %v2354 = vpack.c.b16 %v2266, %v2264
    %v2355 = vpack.c.b16 %v2269, %v2267
    %v2356 = vpack.c.b16 %v2270, %v2268
    %v2357 = vpack.c.b16 %v2273, %v2271
    %v2358 = vpack.c.b16 %v2274, %v2272
    %v2359 = vpack.c.b16 %v2277, %v2275
    %v2360 = vpack.c.b16 %v2278, %v2276
    %v2361 = vpack.c.b16 %v2281, %v2279
    %v2362 = vpack.c.b16 %v2282, %v2280
    %v2363 = vpack.c.b16 %v2285, %v2283
    %v2364 = vpack.c.b16 %v2286, %v2284
    %v2365 = vpack.c.b16 %v2289, %v2287
    %v2366 = vpack.c.b16 %v2290, %v2288
    %v2367 = vpack.c.b16 %v2293, %v2291
    %v2368 = vpack.c.b16 %v2294, %v2292
    %v2369 = vpack.c.b16 %v2297, %v2295
    %v2370 = vpack.c.b16 %v2298, %v2296
    %v2371 = vpack.c.b16 %v2301, %v2299
    %v2372 = vpack.c.b16 %v2302, %v2300
    %v2373 = vpack.c.b16 %v2305, %v2303
    %v2374 = vpack.c.b16 %v2306, %v2304
    %v2375 = vpack.c.b16 %v2309, %v2307
    %v2376 = vpack.c.b16 %v2310, %v2308
    %v2377 = vpack.c.b16 %v2313, %v2311
    %v2378 = vpack.c.b16 %v2314, %v2312
    %2443 = vmatpush.bf16.msra.mxu0 %v2329
    %2444 = vmatpush.bf16.msra.mxu0 %v2327
    %2445 = vmatpush.bf16.msra.mxu0 %v2325
    %2446 = vmatpush.bf16.msra.mxu0 %v2323
    %2447 = vmatpush.bf16.msra.mxu0 %v2321
    %2448 = vmatpush.bf16.msra.mxu0 %v2319
    %2449 = vmatpush.bf16.msra.mxu0 %v2317
    %2450 = vmatpush.bf16.msra.mxu0 %v2315
    %2451 = vmatmul.bf16.gmra.mxu0 %v2049
    %v2452 = vpop.f32.mrf.mxu0
    %v2453 = vadd.f32 %v2119, %v2452
    %v2454 = vpop.f32.mrf.mxu0
    %2455 = vdwg.mxu0
    %2456 = vmatpush.bf16.msra.mxu0 %v2345
    %2457 = vmatpush.bf16.msra.mxu0 %v2343
    %2458 = vmatpush.bf16.msra.mxu0 %v2341
    %2459 = vmatpush.bf16.msra.mxu0 %v2339
    %2460 = vmatpush.bf16.msra.mxu0 %v2337
    %2461 = vmatpush.bf16.msra.mxu0 %v2335
    %2462 = vmatpush.bf16.msra.mxu0 %v2333
    %2463 = vmatpush.bf16.msra.mxu0 %v2331
    %2464 = vmatmul.bf16.gmra.mxu0 %v2050
    %v2465 = vpop.f32.mrf.mxu0
    %v2466 = vadd.f32 %v2453, %v2465
    %v2467 = vpop.f32.mrf.mxu0
    %2468 = vdwg.mxu0
    %2469 = vmatpush.bf16.msra.mxu0 %v2361
    %2470 = vmatpush.bf16.msra.mxu0 %v2359
    %2471 = vmatpush.bf16.msra.mxu0 %v2357
    %2472 = vmatpush.bf16.msra.mxu0 %v2355
    %2473 = vmatpush.bf16.msra.mxu0 %v2353
    %2474 = vmatpush.bf16.msra.mxu0 %v2351
    %2475 = vmatpush.bf16.msra.mxu0 %v2349
    %2476 = vmatpush.bf16.msra.mxu0 %v2347
    %2477 = vmatmul.bf16.gmra.mxu0 %v2051
    %v2478 = vpop.f32.mrf.mxu0
    %v2479 = vadd.f32 %v2466, %v2478
    %v2480 = vpop.f32.mrf.mxu0
    %2481 = vdwg.mxu0
    %2482 = vmatpush.bf16.msra.mxu0 %v2377
    %2483 = vmatpush.bf16.msra.mxu0 %v2375
    %2484 = vmatpush.bf16.msra.mxu0 %v2373
    %2485 = vmatpush.bf16.msra.mxu0 %v2371
    %2486 = vmatpush.bf16.msra.mxu0 %v2369
    %2487 = vmatpush.bf16.msra.mxu0 %v2367
    %2488 = vmatpush.bf16.msra.mxu0 %v2365
    %2489 = vmatpush.bf16.msra.mxu0 %v2363
    %2490 = vmatmul.bf16.gmra.mxu0 %v2052
    %v2491 = vpop.f32.mrf.mxu0
    %v2492 = vadd.f32 %v2479, %v2491
    %v2493 = vpop.f32.mrf.mxu0
    %2494 = vdwg.mxu0
    %2495 = vmatpush.bf16.msra.mxu0 %v2330
    %2496 = vmatpush.bf16.msra.mxu0 %v2328
    %2497 = vmatpush.bf16.msra.mxu0 %v2326
    %2498 = vmatpush.bf16.msra.mxu0 %v2324
    %2499 = vmatpush.bf16.msra.mxu0 %v2322
    %2500 = vmatpush.bf16.msra.mxu0 %v2320
    %2501 = vmatpush.bf16.msra.mxu0 %v2318
    %2502 = vmatpush.bf16.msra.mxu0 %v2316
    %2503 = vmatmul.bf16.gmra.mxu0 %v2049
    %v2504 = vpop.f32.mrf.mxu0
    %v2505 = vadd.f32 %v2120, %v2504
    %v2506 = vpop.f32.mrf.mxu0
    %2507 = vdwg.mxu0
    %2508 = vmatpush.bf16.msra.mxu0 %v2346
    %2509 = vmatpush.bf16.msra.mxu0 %v2344
    %2510 = vmatpush.bf16.msra.mxu0 %v2342
    %2511 = vmatpush.bf16.msra.mxu0 %v2340
    %2512 = vmatpush.bf16.msra.mxu0 %v2338
    %2513 = vmatpush.bf16.msra.mxu0 %v2336
    %2514 = vmatpush.bf16.msra.mxu0 %v2334
    %2515 = vmatpush.bf16.msra.mxu0 %v2332
    %2516 = vmatmul.bf16.gmra.mxu0 %v2050
    %v2517 = vpop.f32.mrf.mxu0
    %v2518 = vadd.f32 %v2505, %v2517
    %v2519 = vpop.f32.mrf.mxu0
    %2520 = vdwg.mxu0
    %2521 = vmatpush.bf16.msra.mxu0 %v2362
    %2522 = vmatpush.bf16.msra.mxu0 %v2360
    %2523 = vmatpush.bf16.msra.mxu0 %v2358
    %2524 = vmatpush.bf16.msra.mxu0 %v2356
    %2525 = vmatpush.bf16.msra.mxu0 %v2354
    %2526 = vmatpush.bf16.msra.mxu0 %v2352
    %2527 = vmatpush.bf16.msra.mxu0 %v2350
    %2528 = vmatpush.bf16.msra.mxu0 %v2348
    %2529 = vmatmul.bf16.gmra.mxu0 %v2051
    %v2530 = vpop.f32.mrf.mxu0
    %v2531 = vadd.f32 %v2518, %v2530
    %v2532 = vpop.f32.mrf.mxu0
    %2533 = vdwg.mxu0
    %2534 = vmatpush.bf16.msra.mxu0 %v2378
    %2535 = vmatpush.bf16.msra.mxu0 %v2376
    %2536 = vmatpush.bf16.msra.mxu0 %v2374
    %2537 = vmatpush.bf16.msra.mxu0 %v2372
    %2538 = vmatpush.bf16.msra.mxu0 %v2370
    %2539 = vmatpush.bf16.msra.mxu0 %v2368
    %2540 = vmatpush.bf16.msra.mxu0 %v2366
    %2541 = vmatpush.bf16.msra.mxu0 %v2364
    %2542 = vmatmul.bf16.gmra.mxu0 %v2052
    %v2543 = vpop.f32.mrf.mxu0
    %v2544 = vadd.f32 %v2531, %v2543
    %v2545 = vpop.f32.mrf.mxu0
    %2546 = vdwg.mxu0
    %v2547 = vmul.f32 %v2492, 0.2
    %v2548 = vmul.f32 %v2544, 0.2
    %v2549 = vmax.f32 %v2492, %v2547
    %v2550 = vmax.f32 %v2544, %v2548
    %v2551 = vpack.c.bf16 %v2549, %v2549
    %v2552 = vpack.c.bf16 %v2550, %v2550
    %v2553 = vld [vmem:[%s5] sm:$0xf]
    %v2554 = vld [vmem:[%s5 + $0x4] sm:$0xf]
    %v2555 = vld [vmem:[%s5 + $0x8] sm:$0xf]
    %v2556 = vld [vmem:[%s5 + $0xc] sm:$0xf]
    %v2557 = vld [vmem:[%s5 + $0x10] sm:$0xf]
    %v2558 = vld [vmem:[%s5 + $0x14] sm:$0xf]
    %v2559 = vld [vmem:[%s5 + $0x18] sm:$0xf]
    %v2560 = vld [vmem:[%s5 + $0x1c] sm:$0xf]
    %v2561 = vld [vmem:[%s5 + $0x20] sm:$0xf]
    %v2562 = vld [vmem:[%s5 + $0x24] sm:$0xf]
    %v2563 = vld [vmem:[%s5 + $0x28] sm:$0xf]
    %v2564 = vld [vmem:[%s5 + $0x2c] sm:$0xf]
    %v2565 = vld [vmem:[%s5 + $0x30] sm:$0xf]
    %v2566 = vld [vmem:[%s5 + $0x34] sm:$0xf]
    %v2567 = vld [vmem:[%s5 + $0x38] sm:$0xf]
    %v2568 = vld [vmem:[%s5 + $0x3c] sm:$0xf]
    %v2569 = vld [vmem:[%s5 + $0x40] sm:$0xf]
    %v2570 = vld [vmem:[%s5 + $0x44] sm:$0xf]
    %v2571 = vld [vmem:[%s5 + $0x48] sm:$0xf]
    %v2572 = vld [vmem:[%s5 + $0x4c] sm:$0xf]
    %v2573 = vld [vmem:[%s5 + $0x50] sm:$0xf]
    %v2574 = vld [vmem:[%s5 + $0x54] sm:$0xf]
    %v2575 = vld [vmem:[%s5 + $0x58] sm:$0xf]
    %v2576 = vld [vmem:[%s5 + $0x5c] sm:$0xf]
    %v2577 = vld [vmem:[%s5 + $0x60] sm:$0xf]
    %v2578 = vld [vmem:[%s5 + $0x64] sm:$0xf]
    %v2579 = vld [vmem:[%s5 + $0x68] sm:$0xf]
    %v2580 = vld [vmem:[%s5 + $0x6c] sm:$0xf]
    %v2581 = vld [vmem:[%s5 + $0x70] sm:$0xf]
    %v2582 = vld [vmem:[%s5 + $0x74] sm:$0xf]
    %v2583 = vld [vmem:[%s5 + $0x78] sm:$0xf]
    %v2584 = vld [vmem:[%s5 + $0x7c] sm:$0xf]
    %v2585 = vld [vmem:[%s6] sm:$0x1]
    %v2587 = vperm.slane %v2585, 0
    %v2621 = vunpack.c.l.b16 %v2553
    %v2622 = vunpack.c.l.b16 %v2554
    %v2623 = vunpack.c.l.b16 %v2555
    %v2624 = vunpack.c.l.b16 %v2556
    %v2625 = vunpack.c.l.b16 %v2557
    %v2626 = vunpack.c.l.b16 %v2558
    %v2627 = vunpack.c.l.b16 %v2559
    %v2628 = vunpack.c.l.b16 %v2560
    %v2629 = vunpack.c.l.b16 %v2561
    %v2630 = vunpack.c.l.b16 %v2562
    %v2631 = vunpack.c.l.b16 %v2563
    %v2632 = vunpack.c.l.b16 %v2564
    %v2633 = vunpack.c.l.b16 %v2565
    %v2634 = vunpack.c.l.b16 %v2566
    %v2635 = vunpack.c.l.b16 %v2567
    %v2636 = vunpack.c.l.b16 %v2568
    %v2637 = vunpack.c.l.b16 %v2569
    %v2638 = vunpack.c.l.b16 %v2570
    %v2639 = vunpack.c.l.b16 %v2571
    %v2640 = vunpack.c.l.b16 %v2572
    %v2641 = vunpack.c.l.b16 %v2573
    %v2642 = vunpack.c.l.b16 %v2574
    %v2643 = vunpack.c.l.b16 %v2575
    %v2644 = vunpack.c.l.b16 %v2576
    %v2645 = vunpack.c.l.b16 %v2577
    %v2646 = vunpack.c.l.b16 %v2578
    %v2647 = vunpack.c.l.b16 %v2579
    %v2648 = vunpack.c.l.b16 %v2580
    %v2649 = vunpack.c.l.b16 %v2581
    %v2650 = vunpack.c.l.b16 %v2582
    %v2651 = vunpack.c.l.b16 %v2583
    %v2652 = vunpack.c.l.b16 %v2584
    %v2653 = vpack.c.b16 %v2622, %v2621
    %v2654 = vpack.c.b16 %v2624, %v2623
    %v2655 = vpack.c.b16 %v2626, %v2625
    %v2656 = vpack.c.b16 %v2628, %v2627
    %v2657 = vpack.c.b16 %v2630, %v2629
    %v2658 = vpack.c.b16 %v2632, %v2631
    %v2659 = vpack.c.b16 %v2634, %v2633
    %v2660 = vpack.c.b16 %v2636, %v2635
    %v2661 = vpack.c.b16 %v2638, %v2637
    %v2662 = vpack.c.b16 %v2640, %v2639
    %v2663 = vpack.c.b16 %v2642, %v2641
    %v2664 = vpack.c.b16 %v2644, %v2643
    %v2665 = vpack.c.b16 %v2646, %v2645
    %v2666 = vpack.c.b16 %v2648, %v2647
    %v2667 = vpack.c.b16 %v2650, %v2649
    %v2668 = vpack.c.b16 %v2652, %v2651
    %2685 = vmatpush.bf16.msra.mxu0 %v2660
    %2686 = vmatpush.bf16.msra.mxu0 %v2659
    %2687 = vmatpush.bf16.msra.mxu0 %v2658
    %2688 = vmatpush.bf16.msra.mxu0 %v2657
    %2689 = vmatpush.bf16.msra.mxu0 %v2656
    %2690 = vmatpush.bf16.msra.mxu0 %v2655
    %2691 = vmatpush.bf16.msra.mxu0 %v2654
    %2692 = vmatpush.bf16.msra.mxu0 %v2653
    %2693 = vmatmul.bf16.gmra.mxu0 %v2551
    %v2694 = vpop.f32.mrf.mxu0
    %v2695 = vadd.f32 %v2587, %v2694
    %v2696 = vpop.f32.mrf.mxu0
    %2697 = vdwg.mxu0
    %2698 = vmatpush.bf16.msra.mxu0 %v2668
    %2699 = vmatpush.bf16.msra.mxu0 %v2667
    %2700 = vmatpush.bf16.msra.mxu0 %v2666
    %2701 = vmatpush.bf16.msra.mxu0 %v2665
    %2702 = vmatpush.bf16.msra.mxu0 %v2664
    %2703 = vmatpush.bf16.msra.mxu0 %v2663
    %2704 = vmatpush.bf16.msra.mxu0 %v2662
    %2705 = vmatpush.bf16.msra.mxu0 %v2661
    %2706 = vmatmul.bf16.gmra.mxu0 %v2552
    %v2707 = vpop.f32.mrf.mxu0
    %v2708 = vadd.f32 %v2695, %v2707
    %v2709 = vpop.f32.mrf.mxu0
    %2710 = vdwg.mxu0
    %v2711 = vmul.f32 %v2708, 0.2
    %v2712 = vmax.f32 %v2708, %v2711
    %v2713 = vpack.c.bf16 %v2712, %v2712
    %v2714 = vld [vmem:[%s7] sm:$0xf]
    %v2715 = vld [vmem:[%s7 + $0x4] sm:$0xf]
    %v2716 = vld [vmem:[%s7 + $0x8] sm:$0xf]
    %v2717 = vld [vmem:[%s7 + $0xc] sm:$0xf]
    %v2718 = vld [vmem:[%s7 + $0x10] sm:$0xf]
    %v2719 = vld [vmem:[%s7 + $0x14] sm:$0xf]
    %v2720 = vld [vmem:[%s7 + $0x18] sm:$0xf]
    %v2721 = vld [vmem:[%s7 + $0x1c] sm:$0xf]
    %v2722 = vld [vmem:[%s7 + $0x20] sm:$0xf]
    %v2723 = vld [vmem:[%s7 + $0x24] sm:$0xf]
    %v2724 = vld [vmem:[%s7 + $0x28] sm:$0xf]
    %v2725 = vld [vmem:[%s7 + $0x2c] sm:$0xf]
    %v2726 = vld [vmem:[%s7 + $0x30] sm:$0xf]
    %v2727 = vld [vmem:[%s7 + $0x34] sm:$0xf]
    %v2728 = vld [vmem:[%s7 + $0x38] sm:$0xf]
    %v2729 = vld [vmem:[%s7 + $0x3c] sm:$0xf]
    %v2730 = vld [vmem:[%s8] sm:$0x1]
    %v2732 = vperm.slane %v2730, 0
    %v2750 = vunpack.c.l.b16 %v2714
    %v2751 = vunpack.c.l.b16 %v2715
    %v2752 = vunpack.c.l.b16 %v2716
    %v2753 = vunpack.c.l.b16 %v2717
    %v2754 = vunpack.c.l.b16 %v2718
    %v2755 = vunpack.c.l.b16 %v2719
    %v2756 = vunpack.c.l.b16 %v2720
    %v2757 = vunpack.c.l.b16 %v2721
    %v2758 = vunpack.c.l.b16 %v2722
    %v2759 = vunpack.c.l.b16 %v2723
    %v2760 = vunpack.c.l.b16 %v2724
    %v2761 = vunpack.c.l.b16 %v2725
    %v2762 = vunpack.c.l.b16 %v2726
    %v2763 = vunpack.c.l.b16 %v2727
    %v2764 = vunpack.c.l.b16 %v2728
    %v2765 = vunpack.c.l.b16 %v2729
    %v2766 = vpack.c.b16 %v2751, %v2750
    %v2767 = vpack.c.b16 %v2753, %v2752
    %v2768 = vpack.c.b16 %v2755, %v2754
    %v2769 = vpack.c.b16 %v2757, %v2756
    %v2770 = vpack.c.b16 %v2759, %v2758
    %v2771 = vpack.c.b16 %v2761, %v2760
    %v2772 = vpack.c.b16 %v2763, %v2762
    %v2773 = vpack.c.b16 %v2765, %v2764
    %2782 = vmatpush.bf16.msra.mxu0 %v2773
    %2783 = vmatpush.bf16.msra.mxu0 %v2772
    %2784 = vmatpush.bf16.msra.mxu0 %v2771
    %2785 = vmatpush.bf16.msra.mxu0 %v2770
    %2786 = vmatpush.bf16.msra.mxu0 %v2769
    %2787 = vmatpush.bf16.msra.mxu0 %v2768
    %2788 = vmatpush.bf16.msra.mxu0 %v2767
    %2789 = vmatpush.bf16.msra.mxu0 %v2766
    %2790 = vmatmul.bf16.gmra.mxu0 %v2713
    %v2791 = vpop.f32.mrf.mxu0
    %v2792 = vadd.f32 %v2732, %v2791
    %v2793 = vpop.f32.mrf.mxu0
    %2794 = vdwg.mxu0
    %2795 = vst [vmem:[%s9] sm:$0x3] %v2792
    // Predicated region
    $region42: #{encoder_forward.1} parent=1 // pred_check
      _
    $region43: #{encoder_forward.1} parent=1 // pred_check_branch
      %2797 = sbr.rel (0) target = $region45
    $region44: #{encoder_forward.1} parent=1 // pred_region
      _
    $region45: #{encoder_forward.1} parent=1 // pred_fallthru
      _
    // Predicated region
    $region46: #{encoder_forward.1} parent=1 // pred_check
      _
    $region47: #{encoder_forward.1} parent=1 // pred_check_branch
      %2799 = sbr.rel (0) target = $region49
    $region48: #{encoder_forward.1} parent=1 // pred_region
      _
    $region49: #{encoder_forward.1} parent=1 // pred_fallthru
      _
    %2800 = vsyncpa [#allocation3], 1

</llo_original>
